<compile_context>
chip_gen: v7x
topology: tpu7x:2x2x1
jax: 0.10.0
libtpu: 0.0.40
codegen_flags: <defaults>
</compile_context>

<pallas_src>
import jax
import jax.numpy as jnp
from jax.experimental import pallas as pl
from jax.experimental.pallas import tpu as pltpu

NUM_POINTS_PER_IT = 5
MAX_IT = 25
TOL = 0.1
G_PRIOR = 0.5
VERTICAL_AXIS = 1        # y is vertical -> dist = w0*x + w1*z + w2 - y

_MAX_IT_PAD = 32         # candidate rows padded to a multiple of 8 (dense sublanes)
_SUB_ROWS = 8            # in-kernel sub-chunk: one (8,128) f32 vreg per channel
_SCORE_TILE_ROWS = 32    # 4096 pts / grid step: 3ch*32*128*4B = 48 KiB per buffer
_DIST_TILE_ROWS = 256    # 32768 px / grid step: (3+1)ch*256*128*4B = 512 KiB per buffer
_PAD_Y = 1e30            # padded ground points get y=1e30 (x=z=0) -> never inliers


def _round_up(x, m):
    return ((x + m - 1) // m) * m


def _row_tiling(n_lanes, max_tile_rows):
    """Dense (rows, 128) tiling of a flat lane axis: (padded_rows, tile_rows) with rows a
    multiple of 8 and of tile_rows, tile_rows <= max_tile_rows (max_tile_rows % 8 == 0)."""
    rows = _round_up(max(n_lanes, 1), 128) // 128
    rows = _round_up(rows, _SUB_ROWS)
    tile = min(max_tile_rows, rows)
    rows = _round_up(rows, tile)
    return rows, tile


def _score_kernel(ws_ref, gp_ref, cnt_ref):
    """Accumulate per-candidate, per-lane inlier counts for one (batch, N-tile) block.

    ws_ref : SMEM (B*MAX_IT*3,)           flat candidate plane params (candidate i at [3i:3i+3])
    gp_ref : VMEM (1, 3, TILE_ROWS, 128)  ground-point tile of points-batch p (dense rows x lanes)
    cnt_ref: VMEM (1, 32, 128)            row j, lane l: inlier count of flat candidate i = j*B+p
                                          (output-resident accumulator across the N-tile axis)
    """
    p = pl.program_id(0)
    nb = pl.num_programs(0)

    @pl.when(pl.program_id(1) == 0)
    def _init():
        cnt_ref[...] = jnp.zeros_like(cnt_ref)

    # Hoist the 25 candidates' scalar params.  torch `points.repeat(max_it,1,1)` pairing:
    # flat candidate i = j*B + p is scored on the points of batch p.
    w = []
    for j in range(MAX_IT):
        base = 3 * (j * nb + p)
        w.append((ws_ref[base], ws_ref[base + 1], ws_ref[base + 2]))

    rows = gp_ref.shape[2]
    # Chunk-outer / candidate-inner: each (8,128) sub-chunk of x/y/z (3 vregs) stays in
    # registers while all 25 candidates are scored against it.
    for s in range(rows // _SUB_ROWS):
        lo = s * _SUB_ROWS
        hi = lo + _SUB_ROWS
        x = gp_ref[0, 0, lo:hi, :]
        y = gp_ref[0, 1, lo:hi, :]
        z = gp_ref[0, 2, lo:hi, :]
        for j in range(MAX_IT):
            w0, w1, w2 = w[j]
            d = x * w0 + z * w1 + (w2 - y)
            inl = (jnp.abs(d) < TOL).astype(jnp.float32)
            cur = cnt_ref[0, j:j + 1, :]
            cnt_ref[0, j:j + 1, :] = cur + jnp.sum(inl, axis=0, keepdims=True)


def _dist_kernel(prm_ref, pts_ref, out_ref):
    """Vertical distance of one (batch, lane-tile) block of points to its selected plane.

    prm_ref: SMEM (B*3,)                  selected plane params (batch b at [3b:3b+3])
    pts_ref: VMEM (1, 3, TILE_ROWS, 128)  point tile (dense rows x lanes)
    out_ref: VMEM (1, TILE_ROWS, 128)     signed distances (full-width dense stores)
    """
    b = pl.program_id(0)
    base = 3 * b
    w0 = prm_ref[base]
    w1 = prm_ref[base + 1]
    w2 = prm_ref[base + 2]

    rows = out_ref.shape[1]
    for s in range(rows // _SUB_ROWS):
        lo = s * _SUB_ROWS
        hi = lo + _SUB_ROWS
        x = pts_ref[0, 0, lo:hi, :]
        y = pts_ref[0, 1, lo:hi, :]
        z = pts_ref[0, 2, lo:hi, :]
        out_ref[0, lo:hi, :] = x * w0 + z * w1 + (w2 - y)


def _candidate_planes(points, key):
    """Random sampling + tiny batched 3x3 least-squares solves (plain JAX glue).

    Returns ws (B, MAX_IT, 3) candidate planes and gp (B, 3, N) ground points (unpadded).
    """
    B, C, H, W = points.shape
    Hg = int(G_PRIOR * H)
    N = Hg * W
    gp = points[:, :, H - Hg:, :].reshape(B, 3, N)                  # (B, 3, N)
    gp_t = jnp.transpose(gp, (0, 2, 1))                             # (B, N, 3)

    # TODO(synk): np.random.choice's RNG stream cannot be reproduced in JAX; sampling uses
    # jax.random.randint (with replacement), so results differ from torch numerically.
    T = NUM_POINTS_PER_IT * MAX_IT
    idx = jax.random.randint(key, (B, T), 0, N)
    rand_pts = jnp.take_along_axis(gp_t, idx[:, :, None], axis=1)   # (B, T, 3)

    rp = rand_pts.reshape(B * MAX_IT, NUM_POINTS_PER_IT, 3)
    A = jnp.stack([rp[..., 0], rp[..., 2], jnp.ones_like(rp[..., 0])], axis=-1)  # (BM,5,3)
    Bv = rp[..., VERTICAL_AXIS:VERTICAL_AXIS + 1]                                # (BM,5,1)
    At = jnp.swapaxes(A, 1, 2)
    AtA = At @ A + 1e-6                  # elementwise +1e-6, exactly like the torch code
    ws = (jnp.linalg.inv(AtA) @ At @ Bv).reshape(B, MAX_IT, 3)      # (B, MAX_IT, 3)
    return ws, gp


def ground_plane_forward(points, key):
    """points: (B, 3, H, W) float32.  Returns (dist2plane (B,1,H,W), plane_param (B,3,1))."""
    B, C, H, W = points.shape
    assert C == 3
    HW = H * W

    ws, gp = _candidate_planes(points, key)          # (B, MAX_IT, 3), (B, 3, N)
    N = gp.shape[-1]
    assert N < 2 ** 24, "f32 inlier counts are exact only for N < 2^24"
    ws_flat = ws.reshape(B * MAX_IT * 3)

    # --- Kernel A: inlier counts, tiled over N with a resident (1,32,128) accumulator -----
    rows_a, tile_a = _row_tiling(N, _SCORE_TILE_ROWS)
    n_pad = rows_a * 128
    if n_pad > N:
        pad = jnp.zeros((B, 3, n_pad - N), jnp.float32)
        pad = pad.at[:, VERTICAL_AXIS, :].set(_PAD_Y)   # padded points can never be inliers
        gp_p = jnp.concatenate([gp, pad], axis=-1)
    else:
        gp_p = gp
    gp_p = gp_p.reshape(B, 3, rows_a, 128)

    cnt = pl.pallas_call(
        _score_kernel,
        out_shape=jax.ShapeDtypeStruct((B, _MAX_IT_PAD, 128), jnp.float32),
        grid=(B, rows_a // tile_a),
        in_specs=[
            pl.BlockSpec(memory_space=pltpu.MemorySpace.SMEM),
            pl.BlockSpec((1, 3, tile_a, 128), lambda p, t: (p, 0, t, 0)),
        ],
        out_specs=pl.BlockSpec((1, _MAX_IT_PAD, 128), lambda p, t: (p, 0, 0)),
        compiler_params=pltpu.CompilerParams(
            dimension_semantics=("parallel", "arbitrary")),
    )(ws_flat, gp_p)

    # cnt[p, j, :] = per-lane inlier counts of flat candidate i = j*B + p.  Finish the tiny
    # lane reduction + 1/N normalisation in plain JAX, then un-permute to the torch layout
    # param_fit[b, m] (flat candidate i = b*MAX_IT + m).
    scores = jnp.sum(cnt[:, :MAX_IT, :], axis=-1) * (1.0 / N)                     # (B, MAX_IT)
    i = jnp.arange(B * MAX_IT)
    param_fit = scores[i % B, i // B].reshape(B, MAX_IT)
    best_fit = jnp.argmax(param_fit, axis=1)                                      # (B,)
    plane_param = jnp.take_along_axis(ws, best_fit[:, None, None], axis=1)[:, 0]  # (B, 3)

    # --- Kernel B: per-pixel distance, dense (rows,128) tiles along the HW lane axis -------
    rows_b, tile_b = _row_tiling(HW, _DIST_TILE_ROWS)
    hw_pad = rows_b * 128
    pts_flat = points.reshape(B, 3, HW)
    if hw_pad > HW:
        pts_flat = jnp.pad(pts_flat, ((0, 0), (0, 0), (0, hw_pad - HW)))
    pts_r = pts_flat.reshape(B, 3, rows_b, 128)

    dist = pl.pallas_call(
        _dist_kernel,
        out_shape=jax.ShapeDtypeStruct((B, rows_b, 128), jnp.float32),
        grid=(B, rows_b // tile_b),
        in_specs=[
            pl.BlockSpec(memory_space=pltpu.MemorySpace.SMEM),
            pl.BlockSpec((1, 3, tile_b, 128), lambda b, t: (b, 0, t, 0)),
        ],
        out_specs=pl.BlockSpec((1, tile_b, 128), lambda b, t: (b, t, 0)),
        compiler_params=pltpu.CompilerParams(
            dimension_semantics=("parallel", "parallel")),
    )(plane_param.reshape(B * 3), pts_r)
    dist2plane = dist.reshape(B, hw_pad)[:, :HW].reshape(B, 1, H, W)

    # plane_param returned as (B, 3, 1) to match the torch module's actual output shape
    return dist2plane, plane_param[:, :, None]


def _reference_forward(points, key):
    """Plain-JAX reference of the whole forward (same RNG, same torch repeat pairing)."""
    B, _, H, W = points.shape
    HW = H * W
    ws, gp = _candidate_planes(points, key)
    gp_t = jnp.transpose(gp, (0, 2, 1))                              # (B, N, 3)
    ws_flat = ws.reshape(B * MAX_IT, 3)
    rep = gp_t[jnp.arange(B * MAX_IT) % B]                           # (B*MAX_IT, N, 3)
    d = (rep[..., 0] * ws_flat[:, 0:1] + rep[..., 2] * ws_flat[:, 1:2]
         + (ws_flat[:, 2:3] - rep[..., 1]))
    param_fit = (jnp.abs(d) < TOL).astype(jnp.float32).mean(-1).reshape(B, MAX_IT)
    best_fit = jnp.argmax(param_fit, axis=1)
    w = jnp.take_along_axis(ws, best_fit[:, None, None], axis=1)[:, 0]
    x = points[:, 0].reshape(B, HW)
    y = points[:, 1].reshape(B, HW)
    z = points[:, 2].reshape(B, HW)
    dist = (x * w[:, 0:1] + z * w[:, 1:2] + (w[:, 2:3] - y)).reshape(B, 1, H, W)
    return dist, w[:, :, None]


if __name__ == "__main__":
    key = jax.random.PRNGKey(0)

    # second shape exercises the lane-padding paths (N and H*W not multiples of 128)
    for shape in [(2, 3, 16, 16), (2, 3, 10, 20)]:
        k_pts, k_samp, key = jax.random.split(key, 3)
        B, _, H, W = shape
        pts = jax.random.normal(k_pts, shape, dtype=jnp.float32)

        dist2plane, plane_param = ground_plane_forward(pts, k_samp)
        jax.block_until_ready((dist2plane, plane_param))

        # correctness check against a pure-JAX reference of the full forward
        ref_dist, ref_param = _reference_forward(pts, k_samp)
        assert dist2plane.shape == (B, 1, H, W) and plane_param.shape == (B, 3, 1)
        assert jnp.allclose(plane_param, ref_param, atol=1e-5, rtol=1e-5)
        assert jnp.allclose(dist2plane, ref_dist, atol=1e-5, rtol=1e-5)

    print("KERNEL_OK")
</pallas_src>

<mosaic_0001>
module attributes {stable_mosaic.version = 11 : i64} {
  func.func @_score_kernel(%arg0: i32, %arg1: i32, %arg2: memref<150xf32, #tpu.memory_space<smem>>, %arg3: memref<1x3x8x128xf32, #tpu.memory_space<vmem>>, %arg4: memref<1x32x128xf32, #tpu.memory_space<vmem>>) attributes {dimension_semantics = [#tpu.dimension_semantics<parallel>, #tpu.dimension_semantics<arbitrary>], iteration_bounds = array<i64: 2, 1>, scalar_prefetch = 0 : i64, scratch_operands = 0 : i64, tpu.core_type = #tpu.core_type<tc>, window_params = [{transform_indices = @transform_0, window_bounds = array<i64: 150>}, {transform_indices = @transform_1, window_bounds = array<i64: 1, 3, 8, 128>}, {transform_indices = @transform_2, window_bounds = array<i64: 1, 32, 128>}]} {
    %c0_i32 = arith.constant 0 : i32
    %0 = arith.cmpi eq, %arg1, %c0_i32 : i32
    %1 = arith.extui %0 : i1 to i32
    %c0_i32_0 = arith.constant 0 : i32
    %2 = arith.cmpi ne, %1, %c0_i32_0 : i32
    scf.if %2 {
      %cst_261 = arith.constant 0.000000e+00 : f32
      %784 = vector.broadcast %cst_261 : f32 to vector<1x32x128xf32>
      %c0_262 = arith.constant 0 : index
      %c0_263 = arith.constant 0 : index
      %c0_264 = arith.constant 0 : index
      %785 = vector.load %arg4[%c0_262, %c0_263, %c0_264] : memref<1x32x128xf32, #tpu.memory_space<vmem>>, vector<1x32x128xf32>
      tpu.vector_store %arg4[%c0_262, %c0_263, %c0_264], %784 {strides = array<i32>} : memref<1x32x128xf32, #tpu.memory_space<vmem>>, vector<1x32x128xf32>,
    } else {
    }
    %c0_i32_1 = arith.constant 0 : i32
    %3 = arith.addi %c0_i32_1, %arg0 : i32
    %c3_i32 = arith.constant 3 : i32
    %4 = arith.muli %c3_i32, %3 : i32
    %5 = arith.index_cast %4 : i32 to index
    %6 = memref.load %arg2[%5] : memref<150xf32, #tpu.memory_space<smem>>
    %c1_i32 = arith.constant 1 : i32
    %7 = arith.addi %4, %c1_i32 : i32
    %8 = arith.index_cast %7 : i32 to index
    %9 = memref.load %arg2[%8] : memref<150xf32, #tpu.memory_space<smem>>
    %c2_i32 = arith.constant 2 : i32
    %10 = arith.addi %4, %c2_i32 : i32
    %11 = arith.index_cast %10 : i32 to index
    %12 = memref.load %arg2[%11] : memref<150xf32, #tpu.memory_space<smem>>
    %c2_i32_2 = arith.constant 2 : i32
    %13 = arith.addi %c2_i32_2, %arg0 : i32
    %c3_i32_3 = arith.constant 3 : i32
    %14 = arith.muli %c3_i32_3, %13 : i32
    %15 = arith.index_cast %14 : i32 to index
    %16 = memref.load %arg2[%15] : memref<150xf32, #tpu.memory_space<smem>>
    %c1_i32_4 = arith.constant 1 : i32
    %17 = arith.addi %14, %c1_i32_4 : i32
    %18 = arith.index_cast %17 : i32 to index
    %19 = memref.load %arg2[%18] : memref<150xf32, #tpu.memory_space<smem>>
    %c2_i32_5 = arith.constant 2 : i32
    %20 = arith.addi %14, %c2_i32_5 : i32
    %21 = arith.index_cast %20 : i32 to index
    %22 = memref.load %arg2[%21] : memref<150xf32, #tpu.memory_space<smem>>
    %c4_i32 = arith.constant 4 : i32
    %23 = arith.addi %c4_i32, %arg0 : i32
    %c3_i32_6 = arith.constant 3 : i32
    %24 = arith.muli %c3_i32_6, %23 : i32
    %25 = arith.index_cast %24 : i32 to index
    %26 = memref.load %arg2[%25] : memref<150xf32, #tpu.memory_space<smem>>
    %c1_i32_7 = arith.constant 1 : i32
    %27 = arith.addi %24, %c1_i32_7 : i32
    %28 = arith.index_cast %27 : i32 to index
    %29 = memref.load %arg2[%28] : memref<150xf32, #tpu.memory_space<smem>>
    %c2_i32_8 = arith.constant 2 : i32
    %30 = arith.addi %24, %c2_i32_8 : i32
    %31 = arith.index_cast %30 : i32 to index
    %32 = memref.load %arg2[%31] : memref<150xf32, #tpu.memory_space<smem>>
    %c6_i32 = arith.constant 6 : i32
    %33 = arith.addi %c6_i32, %arg0 : i32
    %c3_i32_9 = arith.constant 3 : i32
    %34 = arith.muli %c3_i32_9, %33 : i32
    %35 = arith.index_cast %34 : i32 to index
    %36 = memref.load %arg2[%35] : memref<150xf32, #tpu.memory_space<smem>>
    %c1_i32_10 = arith.constant 1 : i32
    %37 = arith.addi %34, %c1_i32_10 : i32
    %38 = arith.index_cast %37 : i32 to index
    %39 = memref.load %arg2[%38] : memref<150xf32, #tpu.memory_space<smem>>
    %c2_i32_11 = arith.constant 2 : i32
    %40 = arith.addi %34, %c2_i32_11 : i32
    %41 = arith.index_cast %40 : i32 to index
    %42 = memref.load %arg2[%41] : memref<150xf32, #tpu.memory_space<smem>>
    %c8_i32 = arith.constant 8 : i32
    %43 = arith.addi %c8_i32, %arg0 : i32
    %c3_i32_12 = arith.constant 3 : i32
    %44 = arith.muli %c3_i32_12, %43 : i32
    %45 = arith.index_cast %44 : i32 to index
    %46 = memref.load %arg2[%45] : memref<150xf32, #tpu.memory_space<smem>>
    %c1_i32_13 = arith.constant 1 : i32
    %47 = arith.addi %44, %c1_i32_13 : i32
    %48 = arith.index_cast %47 : i32 to index
    %49 = memref.load %arg2[%48] : memref<150xf32, #tpu.memory_space<smem>>
    %c2_i32_14 = arith.constant 2 : i32
    %50 = arith.addi %44, %c2_i32_14 : i32
    %51 = arith.index_cast %50 : i32 to index
    %52 = memref.load %arg2[%51] : memref<150xf32, #tpu.memory_space<smem>>
    %c10_i32 = arith.constant 10 : i32
    %53 = arith.addi %c10_i32, %arg0 : i32
    %c3_i32_15 = arith.constant 3 : i32
    %54 = arith.muli %c3_i32_15, %53 : i32
    %55 = arith.index_cast %54 : i32 to index
    %56 = memref.load %arg2[%55] : memref<150xf32, #tpu.memory_space<smem>>
    %c1_i32_16 = arith.constant 1 : i32
    %57 = arith.addi %54, %c1_i32_16 : i32
    %58 = arith.index_cast %57 : i32 to index
    %59 = memref.load %arg2[%58] : memref<150xf32, #tpu.memory_space<smem>>
    %c2_i32_17 = arith.constant 2 : i32
    %60 = arith.addi %54, %c2_i32_17 : i32
    %61 = arith.index_cast %60 : i32 to index
    %62 = memref.load %arg2[%61] : memref<150xf32, #tpu.memory_space<smem>>
    %c12_i32 = arith.constant 12 : i32
    %63 = arith.addi %c12_i32, %arg0 : i32
    %c3_i32_18 = arith.constant 3 : i32
    %64 = arith.muli %c3_i32_18, %63 : i32
    %65 = arith.index_cast %64 : i32 to index
    %66 = memref.load %arg2[%65] : memref<150xf32, #tpu.memory_space<smem>>
    %c1_i32_19 = arith.constant 1 : i32
    %67 = arith.addi %64, %c1_i32_19 : i32
    %68 = arith.index_cast %67 : i32 to index
    %69 = memref.load %arg2[%68] : memref<150xf32, #tpu.memory_space<smem>>
    %c2_i32_20 = arith.constant 2 : i32
    %70 = arith.addi %64, %c2_i32_20 : i32
    %71 = arith.index_cast %70 : i32 to index
    %72 = memref.load %arg2[%71] : memref<150xf32, #tpu.memory_space<smem>>
    %c14_i32 = arith.constant 14 : i32
    %73 = arith.addi %c14_i32, %arg0 : i32
    %c3_i32_21 = arith.constant 3 : i32
    %74 = arith.muli %c3_i32_21, %73 : i32
    %75 = arith.index_cast %74 : i32 to index
    %76 = memref.load %arg2[%75] : memref<150xf32, #tpu.memory_space<smem>>
    %c1_i32_22 = arith.constant 1 : i32
    %77 = arith.addi %74, %c1_i32_22 : i32
    %78 = arith.index_cast %77 : i32 to index
    %79 = memref.load %arg2[%78] : memref<150xf32, #tpu.memory_space<smem>>
    %c2_i32_23 = arith.constant 2 : i32
    %80 = arith.addi %74, %c2_i32_23 : i32
    %81 = arith.index_cast %80 : i32 to index
    %82 = memref.load %arg2[%81] : memref<150xf32, #tpu.memory_space<smem>>
    %c16_i32 = arith.constant 16 : i32
    %83 = arith.addi %c16_i32, %arg0 : i32
    %c3_i32_24 = arith.constant 3 : i32
    %84 = arith.muli %c3_i32_24, %83 : i32
    %85 = arith.index_cast %84 : i32 to index
    %86 = memref.load %arg2[%85] : memref<150xf32, #tpu.memory_space<smem>>
    %c1_i32_25 = arith.constant 1 : i32
    %87 = arith.addi %84, %c1_i32_25 : i32
    %88 = arith.index_cast %87 : i32 to index
    %89 = memref.load %arg2[%88] : memref<150xf32, #tpu.memory_space<smem>>
    %c2_i32_26 = arith.constant 2 : i32
    %90 = arith.addi %84, %c2_i32_26 : i32
    %91 = arith.index_cast %90 : i32 to index
    %92 = memref.load %arg2[%91] : memref<150xf32, #tpu.memory_space<smem>>
    %c18_i32 = arith.constant 18 : i32
    %93 = arith.addi %c18_i32, %arg0 : i32
    %c3_i32_27 = arith.constant 3 : i32
    %94 = arith.muli %c3_i32_27, %93 : i32
    %95 = arith.index_cast %94 : i32 to index
    %96 = memref.load %arg2[%95] : memref<150xf32, #tpu.memory_space<smem>>
    %c1_i32_28 = arith.constant 1 : i32
    %97 = arith.addi %94, %c1_i32_28 : i32
    %98 = arith.index_cast %97 : i32 to index
    %99 = memref.load %arg2[%98] : memref<150xf32, #tpu.memory_space<smem>>
    %c2_i32_29 = arith.constant 2 : i32
    %100 = arith.addi %94, %c2_i32_29 : i32
    %101 = arith.index_cast %100 : i32 to index
    %102 = memref.load %arg2[%101] : memref<150xf32, #tpu.memory_space<smem>>
    %c20_i32 = arith.constant 20 : i32
    %103 = arith.addi %c20_i32, %arg0 : i32
    %c3_i32_30 = arith.constant 3 : i32
    %104 = arith.muli %c3_i32_30, %103 : i32
    %105 = arith.index_cast %104 : i32 to index
    %106 = memref.load %arg2[%105] : memref<150xf32, #tpu.memory_space<smem>>
    %c1_i32_31 = arith.constant 1 : i32
    %107 = arith.addi %104, %c1_i32_31 : i32
    %108 = arith.index_cast %107 : i32 to index
    %109 = memref.load %arg2[%108] : memref<150xf32, #tpu.memory_space<smem>>
    %c2_i32_32 = arith.constant 2 : i32
    %110 = arith.addi %104, %c2_i32_32 : i32
    %111 = arith.index_cast %110 : i32 to index
    %112 = memref.load %arg2[%111] : memref<150xf32, #tpu.memory_space<smem>>
    %c22_i32 = arith.constant 22 : i32
    %113 = arith.addi %c22_i32, %arg0 : i32
    %c3_i32_33 = arith.constant 3 : i32
    %114 = arith.muli %c3_i32_33, %113 : i32
    %115 = arith.index_cast %114 : i32 to index
    %116 = memref.load %arg2[%115] : memref<150xf32, #tpu.memory_space<smem>>
    %c1_i32_34 = arith.constant 1 : i32
    %117 = arith.addi %114, %c1_i32_34 : i32
    %118 = arith.index_cast %117 : i32 to index
    %119 = memref.load %arg2[%118] : memref<150xf32, #tpu.memory_space<smem>>
    %c2_i32_35 = arith.constant 2 : i32
    %120 = arith.addi %114, %c2_i32_35 : i32
    %121 = arith.index_cast %120 : i32 to index
    %122 = memref.load %arg2[%121] : memref<150xf32, #tpu.memory_space<smem>>
    %c24_i32 = arith.constant 24 : i32
    %123 = arith.addi %c24_i32, %arg0 : i32
    %c3_i32_36 = arith.constant 3 : i32
    %124 = arith.muli %c3_i32_36, %123 : i32
    %125 = arith.index_cast %124 : i32 to index
    %126 = memref.load %arg2[%125] : memref<150xf32, #tpu.memory_space<smem>>
    %c1_i32_37 = arith.constant 1 : i32
    %127 = arith.addi %124, %c1_i32_37 : i32
    %128 = arith.index_cast %127 : i32 to index
    %129 = memref.load %arg2[%128] : memref<150xf32, #tpu.memory_space<smem>>
    %c2_i32_38 = arith.constant 2 : i32
    %130 = arith.addi %124, %c2_i32_38 : i32
    %131 = arith.index_cast %130 : i32 to index
    %132 = memref.load %arg2[%131] : memref<150xf32, #tpu.memory_space<smem>>
    %c26_i32 = arith.constant 26 : i32
    %133 = arith.addi %c26_i32, %arg0 : i32
    %c3_i32_39 = arith.constant 3 : i32
    %134 = arith.muli %c3_i32_39, %133 : i32
    %135 = arith.index_cast %134 : i32 to index
    %136 = memref.load %arg2[%135] : memref<150xf32, #tpu.memory_space<smem>>
    %c1_i32_40 = arith.constant 1 : i32
    %137 = arith.addi %134, %c1_i32_40 : i32
    %138 = arith.index_cast %137 : i32 to index
    %139 = memref.load %arg2[%138] : memref<150xf32, #tpu.memory_space<smem>>
    %c2_i32_41 = arith.constant 2 : i32
    %140 = arith.addi %134, %c2_i32_41 : i32
    %141 = arith.index_cast %140 : i32 to index
    %142 = memref.load %arg2[%141] : memref<150xf32, #tpu.memory_space<smem>>
    %c28_i32 = arith.constant 28 : i32
    %143 = arith.addi %c28_i32, %arg0 : i32
    %c3_i32_42 = arith.constant 3 : i32
    %144 = arith.muli %c3_i32_42, %143 : i32
    %145 = arith.index_cast %144 : i32 to index
    %146 = memref.load %arg2[%145] : memref<150xf32, #tpu.memory_space<smem>>
    %c1_i32_43 = arith.constant 1 : i32
    %147 = arith.addi %144, %c1_i32_43 : i32
    %148 = arith.index_cast %147 : i32 to index
    %149 = memref.load %arg2[%148] : memref<150xf32, #tpu.memory_space<smem>>
    %c2_i32_44 = arith.constant 2 : i32
    %150 = arith.addi %144, %c2_i32_44 : i32
    %151 = arith.index_cast %150 : i32 to index
    %152 = memref.load %arg2[%151] : memref<150xf32, #tpu.memory_space<smem>>
    %c30_i32 = arith.constant 30 : i32
    %153 = arith.addi %c30_i32, %arg0 : i32
    %c3_i32_45 = arith.constant 3 : i32
    %154 = arith.muli %c3_i32_45, %153 : i32
    %155 = arith.index_cast %154 : i32 to index
    %156 = memref.load %arg2[%155] : memref<150xf32, #tpu.memory_space<smem>>
    %c1_i32_46 = arith.constant 1 : i32
    %157 = arith.addi %154, %c1_i32_46 : i32
    %158 = arith.index_cast %157 : i32 to index
    %159 = memref.load %arg2[%158] : memref<150xf32, #tpu.memory_space<smem>>
    %c2_i32_47 = arith.constant 2 : i32
    %160 = arith.addi %154, %c2_i32_47 : i32
    %161 = arith.index_cast %160 : i32 to index
    %162 = memref.load %arg2[%161] : memref<150xf32, #tpu.memory_space<smem>>
    %c32_i32 = arith.constant 32 : i32
    %163 = arith.addi %c32_i32, %arg0 : i32
    %c3_i32_48 = arith.constant 3 : i32
    %164 = arith.muli %c3_i32_48, %163 : i32
    %165 = arith.index_cast %164 : i32 to index
    %166 = memref.load %arg2[%165] : memref<150xf32, #tpu.memory_space<smem>>
    %c1_i32_49 = arith.constant 1 : i32
    %167 = arith.addi %164, %c1_i32_49 : i32
    %168 = arith.index_cast %167 : i32 to index
    %169 = memref.load %arg2[%168] : memref<150xf32, #tpu.memory_space<smem>>
    %c2_i32_50 = arith.constant 2 : i32
    %170 = arith.addi %164, %c2_i32_50 : i32
    %171 = arith.index_cast %170 : i32 to index
    %172 = memref.load %arg2[%171] : memref<150xf32, #tpu.memory_space<smem>>
    %c34_i32 = arith.constant 34 : i32
    %173 = arith.addi %c34_i32, %arg0 : i32
    %c3_i32_51 = arith.constant 3 : i32
    %174 = arith.muli %c3_i32_51, %173 : i32
    %175 = arith.index_cast %174 : i32 to index
    %176 = memref.load %arg2[%175] : memref<150xf32, #tpu.memory_space<smem>>
    %c1_i32_52 = arith.constant 1 : i32
    %177 = arith.addi %174, %c1_i32_52 : i32
    %178 = arith.index_cast %177 : i32 to index
    %179 = memref.load %arg2[%178] : memref<150xf32, #tpu.memory_space<smem>>
    %c2_i32_53 = arith.constant 2 : i32
    %180 = arith.addi %174, %c2_i32_53 : i32
    %181 = arith.index_cast %180 : i32 to index
    %182 = memref.load %arg2[%181] : memref<150xf32, #tpu.memory_space<smem>>
    %c36_i32 = arith.constant 36 : i32
    %183 = arith.addi %c36_i32, %arg0 : i32
    %c3_i32_54 = arith.constant 3 : i32
    %184 = arith.muli %c3_i32_54, %183 : i32
    %185 = arith.index_cast %184 : i32 to index
    %186 = memref.load %arg2[%185] : memref<150xf32, #tpu.memory_space<smem>>
    %c1_i32_55 = arith.constant 1 : i32
    %187 = arith.addi %184, %c1_i32_55 : i32
    %188 = arith.index_cast %187 : i32 to index
    %189 = memref.load %arg2[%188] : memref<150xf32, #tpu.memory_space<smem>>
    %c2_i32_56 = arith.constant 2 : i32
    %190 = arith.addi %184, %c2_i32_56 : i32
    %191 = arith.index_cast %190 : i32 to index
    %192 = memref.load %arg2[%191] : memref<150xf32, #tpu.memory_space<smem>>
    %c38_i32 = arith.constant 38 : i32
    %193 = arith.addi %c38_i32, %arg0 : i32
    %c3_i32_57 = arith.constant 3 : i32
    %194 = arith.muli %c3_i32_57, %193 : i32
    %195 = arith.index_cast %194 : i32 to index
    %196 = memref.load %arg2[%195] : memref<150xf32, #tpu.memory_space<smem>>
    %c1_i32_58 = arith.constant 1 : i32
    %197 = arith.addi %194, %c1_i32_58 : i32
    %198 = arith.index_cast %197 : i32 to index
    %199 = memref.load %arg2[%198] : memref<150xf32, #tpu.memory_space<smem>>
    %c2_i32_59 = arith.constant 2 : i32
    %200 = arith.addi %194, %c2_i32_59 : i32
    %201 = arith.index_cast %200 : i32 to index
    %202 = memref.load %arg2[%201] : memref<150xf32, #tpu.memory_space<smem>>
    %c40_i32 = arith.constant 40 : i32
    %203 = arith.addi %c40_i32, %arg0 : i32
    %c3_i32_60 = arith.constant 3 : i32
    %204 = arith.muli %c3_i32_60, %203 : i32
    %205 = arith.index_cast %204 : i32 to index
    %206 = memref.load %arg2[%205] : memref<150xf32, #tpu.memory_space<smem>>
    %c1_i32_61 = arith.constant 1 : i32
    %207 = arith.addi %204, %c1_i32_61 : i32
    %208 = arith.index_cast %207 : i32 to index
    %209 = memref.load %arg2[%208] : memref<150xf32, #tpu.memory_space<smem>>
    %c2_i32_62 = arith.constant 2 : i32
    %210 = arith.addi %204, %c2_i32_62 : i32
    %211 = arith.index_cast %210 : i32 to index
    %212 = memref.load %arg2[%211] : memref<150xf32, #tpu.memory_space<smem>>
    %c42_i32 = arith.constant 42 : i32
    %213 = arith.addi %c42_i32, %arg0 : i32
    %c3_i32_63 = arith.constant 3 : i32
    %214 = arith.muli %c3_i32_63, %213 : i32
    %215 = arith.index_cast %214 : i32 to index
    %216 = memref.load %arg2[%215] : memref<150xf32, #tpu.memory_space<smem>>
    %c1_i32_64 = arith.constant 1 : i32
    %217 = arith.addi %214, %c1_i32_64 : i32
    %218 = arith.index_cast %217 : i32 to index
    %219 = memref.load %arg2[%218] : memref<150xf32, #tpu.memory_space<smem>>
    %c2_i32_65 = arith.constant 2 : i32
    %220 = arith.addi %214, %c2_i32_65 : i32
    %221 = arith.index_cast %220 : i32 to index
    %222 = memref.load %arg2[%221] : memref<150xf32, #tpu.memory_space<smem>>
    %c44_i32 = arith.constant 44 : i32
    %223 = arith.addi %c44_i32, %arg0 : i32
    %c3_i32_66 = arith.constant 3 : i32
    %224 = arith.muli %c3_i32_66, %223 : i32
    %225 = arith.index_cast %224 : i32 to index
    %226 = memref.load %arg2[%225] : memref<150xf32, #tpu.memory_space<smem>>
    %c1_i32_67 = arith.constant 1 : i32
    %227 = arith.addi %224, %c1_i32_67 : i32
    %228 = arith.index_cast %227 : i32 to index
    %229 = memref.load %arg2[%228] : memref<150xf32, #tpu.memory_space<smem>>
    %c2_i32_68 = arith.constant 2 : i32
    %230 = arith.addi %224, %c2_i32_68 : i32
    %231 = arith.index_cast %230 : i32 to index
    %232 = memref.load %arg2[%231] : memref<150xf32, #tpu.memory_space<smem>>
    %c46_i32 = arith.constant 46 : i32
    %233 = arith.addi %c46_i32, %arg0 : i32
    %c3_i32_69 = arith.constant 3 : i32
    %234 = arith.muli %c3_i32_69, %233 : i32
    %235 = arith.index_cast %234 : i32 to index
    %236 = memref.load %arg2[%235] : memref<150xf32, #tpu.memory_space<smem>>
    %c1_i32_70 = arith.constant 1 : i32
    %237 = arith.addi %234, %c1_i32_70 : i32
    %238 = arith.index_cast %237 : i32 to index
    %239 = memref.load %arg2[%238] : memref<150xf32, #tpu.memory_space<smem>>
    %c2_i32_71 = arith.constant 2 : i32
    %240 = arith.addi %234, %c2_i32_71 : i32
    %241 = arith.index_cast %240 : i32 to index
    %242 = memref.load %arg2[%241] : memref<150xf32, #tpu.memory_space<smem>>
    %c48_i32 = arith.constant 48 : i32
    %243 = arith.addi %c48_i32, %arg0 : i32
    %c3_i32_72 = arith.constant 3 : i32
    %244 = arith.muli %c3_i32_72, %243 : i32
    %245 = arith.index_cast %244 : i32 to index
    %246 = memref.load %arg2[%245] : memref<150xf32, #tpu.memory_space<smem>>
    %c1_i32_73 = arith.constant 1 : i32
    %247 = arith.addi %244, %c1_i32_73 : i32
    %248 = arith.index_cast %247 : i32 to index
    %249 = memref.load %arg2[%248] : memref<150xf32, #tpu.memory_space<smem>>
    %c2_i32_74 = arith.constant 2 : i32
    %250 = arith.addi %244, %c2_i32_74 : i32
    %251 = arith.index_cast %250 : i32 to index
    %252 = memref.load %arg2[%251] : memref<150xf32, #tpu.memory_space<smem>>
    %c0 = arith.constant 0 : index
    %c0_75 = arith.constant 0 : index
    %c0_76 = arith.constant 0 : index
    %c0_77 = arith.constant 0 : index
    %253 = vector.load %arg3[%c0, %c0_75, %c0_76, %c0_77] : memref<1x3x8x128xf32, #tpu.memory_space<vmem>>, vector<1x1x8x128xf32>
    %254 = vector.shape_cast %253 : vector<1x1x8x128xf32> to vector<8x128xf32>
    %c0_78 = arith.constant 0 : index
    %c1 = arith.constant 1 : index
    %c0_79 = arith.constant 0 : index
    %c0_80 = arith.constant 0 : index
    %255 = vector.load %arg3[%c0_78, %c1, %c0_79, %c0_80] : memref<1x3x8x128xf32, #tpu.memory_space<vmem>>, vector<1x1x8x128xf32>
    %256 = vector.shape_cast %255 : vector<1x1x8x128xf32> to vector<8x128xf32>
    %c0_81 = arith.constant 0 : index
    %c2 = arith.constant 2 : index
    %c0_82 = arith.constant 0 : index
    %c0_83 = arith.constant 0 : index
    %257 = vector.load %arg3[%c0_81, %c2, %c0_82, %c0_83] : memref<1x3x8x128xf32, #tpu.memory_space<vmem>>, vector<1x1x8x128xf32>
    %258 = vector.shape_cast %257 : vector<1x1x8x128xf32> to vector<8x128xf32>
    %259 = vector.broadcast %6 : f32 to vector<8x128xf32>
    %260 = arith.mulf %254, %259 : vector<8x128xf32>
    %261 = vector.broadcast %9 : f32 to vector<8x128xf32>
    %262 = arith.mulf %258, %261 : vector<8x128xf32>
    %263 = arith.addf %260, %262 : vector<8x128xf32>
    %264 = vector.broadcast %12 : f32 to vector<8x128xf32>
    %265 = arith.subf %264, %256 : vector<8x128xf32>
    %266 = arith.addf %263, %265 : vector<8x128xf32>
    %267 = math.absf %266 : vector<8x128xf32>
    %cst = arith.constant 1.000000e-01 : f32
    %268 = vector.broadcast %cst : f32 to vector<8x128xf32>
    %269 = arith.cmpf olt, %267, %268 : vector<8x128xf32>
    %270 = arith.extui %269 : vector<8x128xi1> to vector<8x128xi32>
    %271 = arith.sitofp %270 : vector<8x128xi32> to vector<8x128xf32>
    %c0_84 = arith.constant 0 : index
    %c0_85 = arith.constant 0 : index
    %c0_86 = arith.constant 0 : index
    %272 = vector.load %arg4[%c0_84, %c0_85, %c0_86] : memref<1x32x128xf32, #tpu.memory_space<vmem>>, vector<1x1x128xf32>
    %273 = vector.shape_cast %272 : vector<1x1x128xf32> to vector<1x128xf32>
    %cst_87 = arith.constant dense<0.000000e+00> : vector<128xf32>
    %274 = vector.multi_reduction <add>, %271, %cst_87 [0] : vector<8x128xf32> to vector<128xf32>
    %275 = vector.shape_cast %274 : vector<128xf32> to vector<1x128xf32>
    %276 = arith.addf %273, %275 : vector<1x128xf32>
    %c0_88 = arith.constant 0 : index
    %c0_89 = arith.constant 0 : index
    %c0_90 = arith.constant 0 : index
    %277 = vector.load %arg4[%c0_88, %c0_89, %c0_90] : memref<1x32x128xf32, #tpu.memory_space<vmem>>, vector<1x1x128xf32>
    %278 = vector.shape_cast %277 : vector<1x1x128xf32> to vector<1x128xf32>
    %279 = vector.shape_cast %276 : vector<1x128xf32> to vector<1x1x128xf32>
    tpu.vector_store %arg4[%c0_88, %c0_89, %c0_90], %279 {strides = array<i32>} : memref<1x32x128xf32, #tpu.memory_space<vmem>>, vector<1x1x128xf32>,
    %280 = vector.broadcast %16 : f32 to vector<8x128xf32>
    %281 = arith.mulf %254, %280 : vector<8x128xf32>
    %282 = vector.broadcast %19 : f32 to vector<8x128xf32>
    %283 = arith.mulf %258, %282 : vector<8x128xf32>
    %284 = arith.addf %281, %283 : vector<8x128xf32>
    %285 = vector.broadcast %22 : f32 to vector<8x128xf32>
    %286 = arith.subf %285, %256 : vector<8x128xf32>
    %287 = arith.addf %284, %286 : vector<8x128xf32>
    %288 = math.absf %287 : vector<8x128xf32>
    %cst_91 = arith.constant 1.000000e-01 : f32
    %289 = vector.broadcast %cst_91 : f32 to vector<8x128xf32>
    %290 = arith.cmpf olt, %288, %289 : vector<8x128xf32>
    %291 = arith.extui %290 : vector<8x128xi1> to vector<8x128xi32>
    %292 = arith.sitofp %291 : vector<8x128xi32> to vector<8x128xf32>
    %c0_92 = arith.constant 0 : index
    %c1_93 = arith.constant 1 : index
    %c0_94 = arith.constant 0 : index
    %293 = vector.load %arg4[%c0_92, %c1_93, %c0_94] : memref<1x32x128xf32, #tpu.memory_space<vmem>>, vector<1x1x128xf32>
    %294 = vector.shape_cast %293 : vector<1x1x128xf32> to vector<1x128xf32>
    %cst_95 = arith.constant dense<0.000000e+00> : vector<128xf32>
    %295 = vector.multi_reduction <add>, %292, %cst_95 [0] : vector<8x128xf32> to vector<128xf32>
    %296 = vector.shape_cast %295 : vector<128xf32> to vector<1x128xf32>
    %297 = arith.addf %294, %296 : vector<1x128xf32>
    %c0_96 = arith.constant 0 : index
    %c1_97 = arith.constant 1 : index
    %c0_98 = arith.constant 0 : index
    %298 = vector.load %arg4[%c0_96, %c1_97, %c0_98] : memref<1x32x128xf32, #tpu.memory_space<vmem>>, vector<1x1x128xf32>
    %299 = vector.shape_cast %298 : vector<1x1x128xf32> to vector<1x128xf32>
    %300 = vector.shape_cast %297 : vector<1x128xf32> to vector<1x1x128xf32>
    tpu.vector_store %arg4[%c0_96, %c1_97, %c0_98], %300 {strides = array<i32>} : memref<1x32x128xf32, #tpu.memory_space<vmem>>, vector<1x1x128xf32>,
    %301 = vector.broadcast %26 : f32 to vector<8x128xf32>
    %302 = arith.mulf %254, %301 : vector<8x128xf32>
    %303 = vector.broadcast %29 : f32 to vector<8x128xf32>
    %304 = arith.mulf %258, %303 : vector<8x128xf32>
    %305 = arith.addf %302, %304 : vector<8x128xf32>
    %306 = vector.broadcast %32 : f32 to vector<8x128xf32>
    %307 = arith.subf %306, %256 : vector<8x128xf32>
    %308 = arith.addf %305, %307 : vector<8x128xf32>
    %309 = math.absf %308 : vector<8x128xf32>
    %cst_99 = arith.constant 1.000000e-01 : f32
    %310 = vector.broadcast %cst_99 : f32 to vector<8x128xf32>
    %311 = arith.cmpf olt, %309, %310 : vector<8x128xf32>
    %312 = arith.extui %311 : vector<8x128xi1> to vector<8x128xi32>
    %313 = arith.sitofp %312 : vector<8x128xi32> to vector<8x128xf32>
    %c0_100 = arith.constant 0 : index
    %c2_101 = arith.constant 2 : index
    %c0_102 = arith.constant 0 : index
    %314 = vector.load %arg4[%c0_100, %c2_101, %c0_102] : memref<1x32x128xf32, #tpu.memory_space<vmem>>, vector<1x1x128xf32>
    %315 = vector.shape_cast %314 : vector<1x1x128xf32> to vector<1x128xf32>
    %cst_103 = arith.constant dense<0.000000e+00> : vector<128xf32>
    %316 = vector.multi_reduction <add>, %313, %cst_103 [0] : vector<8x128xf32> to vector<128xf32>
    %317 = vector.shape_cast %316 : vector<128xf32> to vector<1x128xf32>
    %318 = arith.addf %315, %317 : vector<1x128xf32>
    %c0_104 = arith.constant 0 : index
    %c2_105 = arith.constant 2 : index
    %c0_106 = arith.constant 0 : index
    %319 = vector.load %arg4[%c0_104, %c2_105, %c0_106] : memref<1x32x128xf32, #tpu.memory_space<vmem>>, vector<1x1x128xf32>
    %320 = vector.shape_cast %319 : vector<1x1x128xf32> to vector<1x128xf32>
    %321 = vector.shape_cast %318 : vector<1x128xf32> to vector<1x1x128xf32>
    tpu.vector_store %arg4[%c0_104, %c2_105, %c0_106], %321 {strides = array<i32>} : memref<1x32x128xf32, #tpu.memory_space<vmem>>, vector<1x1x128xf32>,
    %322 = vector.broadcast %36 : f32 to vector<8x128xf32>
    %323 = arith.mulf %254, %322 : vector<8x128xf32>
    %324 = vector.broadcast %39 : f32 to vector<8x128xf32>
    %325 = arith.mulf %258, %324 : vector<8x128xf32>
    %326 = arith.addf %323, %325 : vector<8x128xf32>
    %327 = vector.broadcast %42 : f32 to vector<8x128xf32>
    %328 = arith.subf %327, %256 : vector<8x128xf32>
    %329 = arith.addf %326, %328 : vector<8x128xf32>
    %330 = math.absf %329 : vector<8x128xf32>
    %cst_107 = arith.constant 1.000000e-01 : f32
    %331 = vector.broadcast %cst_107 : f32 to vector<8x128xf32>
    %332 = arith.cmpf olt, %330, %331 : vector<8x128xf32>
    %333 = arith.extui %332 : vector<8x128xi1> to vector<8x128xi32>
    %334 = arith.sitofp %333 : vector<8x128xi32> to vector<8x128xf32>
    %c0_108 = arith.constant 0 : index
    %c3 = arith.constant 3 : index
    %c0_109 = arith.constant 0 : index
    %335 = vector.load %arg4[%c0_108, %c3, %c0_109] : memref<1x32x128xf32, #tpu.memory_space<vmem>>, vector<1x1x128xf32>
    %336 = vector.shape_cast %335 : vector<1x1x128xf32> to vector<1x128xf32>
    %cst_110 = arith.constant dense<0.000000e+00> : vector<128xf32>
    %337 = vector.multi_reduction <add>, %334, %cst_110 [0] : vector<8x128xf32> to vector<128xf32>
    %338 = vector.shape_cast %337 : vector<128xf32> to vector<1x128xf32>
    %339 = arith.addf %336, %338 : vector<1x128xf32>
    %c0_111 = arith.constant 0 : index
    %c3_112 = arith.constant 3 : index
    %c0_113 = arith.constant 0 : index
    %340 = vector.load %arg4[%c0_111, %c3_112, %c0_113] : memref<1x32x128xf32, #tpu.memory_space<vmem>>, vector<1x1x128xf32>
    %341 = vector.shape_cast %340 : vector<1x1x128xf32> to vector<1x128xf32>
    %342 = vector.shape_cast %339 : vector<1x128xf32> to vector<1x1x128xf32>
    tpu.vector_store %arg4[%c0_111, %c3_112, %c0_113], %342 {strides = array<i32>} : memref<1x32x128xf32, #tpu.memory_space<vmem>>, vector<1x1x128xf32>,
    %343 = vector.broadcast %46 : f32 to vector<8x128xf32>
    %344 = arith.mulf %254, %343 : vector<8x128xf32>
    %345 = vector.broadcast %49 : f32 to vector<8x128xf32>
    %346 = arith.mulf %258, %345 : vector<8x128xf32>
    %347 = arith.addf %344, %346 : vector<8x128xf32>
    %348 = vector.broadcast %52 : f32 to vector<8x128xf32>
    %349 = arith.subf %348, %256 : vector<8x128xf32>
    %350 = arith.addf %347, %349 : vector<8x128xf32>
    %351 = math.absf %350 : vector<8x128xf32>
    %cst_114 = arith.constant 1.000000e-01 : f32
    %352 = vector.broadcast %cst_114 : f32 to vector<8x128xf32>
    %353 = arith.cmpf olt, %351, %352 : vector<8x128xf32>
    %354 = arith.extui %353 : vector<8x128xi1> to vector<8x128xi32>
    %355 = arith.sitofp %354 : vector<8x128xi32> to vector<8x128xf32>
    %c0_115 = arith.constant 0 : index
    %c4 = arith.constant 4 : index
    %c0_116 = arith.constant 0 : index
    %356 = vector.load %arg4[%c0_115, %c4, %c0_116] : memref<1x32x128xf32, #tpu.memory_space<vmem>>, vector<1x1x128xf32>
    %357 = vector.shape_cast %356 : vector<1x1x128xf32> to vector<1x128xf32>
    %cst_117 = arith.constant dense<0.000000e+00> : vector<128xf32>
    %358 = vector.multi_reduction <add>, %355, %cst_117 [0] : vector<8x128xf32> to vector<128xf32>
    %359 = vector.shape_cast %358 : vector<128xf32> to vector<1x128xf32>
    %360 = arith.addf %357, %359 : vector<1x128xf32>
    %c0_118 = arith.constant 0 : index
    %c4_119 = arith.constant 4 : index
    %c0_120 = arith.constant 0 : index
    %361 = vector.load %arg4[%c0_118, %c4_119, %c0_120] : memref<1x32x128xf32, #tpu.memory_space<vmem>>, vector<1x1x128xf32>
    %362 = vector.shape_cast %361 : vector<1x1x128xf32> to vector<1x128xf32>
    %363 = vector.shape_cast %360 : vector<1x128xf32> to vector<1x1x128xf32>
    tpu.vector_store %arg4[%c0_118, %c4_119, %c0_120], %363 {strides = array<i32>} : memref<1x32x128xf32, #tpu.memory_space<vmem>>, vector<1x1x128xf32>,
    %364 = vector.broadcast %56 : f32 to vector<8x128xf32>
    %365 = arith.mulf %254, %364 : vector<8x128xf32>
    %366 = vector.broadcast %59 : f32 to vector<8x128xf32>
    %367 = arith.mulf %258, %366 : vector<8x128xf32>
    %368 = arith.addf %365, %367 : vector<8x128xf32>
    %369 = vector.broadcast %62 : f32 to vector<8x128xf32>
    %370 = arith.subf %369, %256 : vector<8x128xf32>
    %371 = arith.addf %368, %370 : vector<8x128xf32>
    %372 = math.absf %371 : vector<8x128xf32>
    %cst_121 = arith.constant 1.000000e-01 : f32
    %373 = vector.broadcast %cst_121 : f32 to vector<8x128xf32>
    %374 = arith.cmpf olt, %372, %373 : vector<8x128xf32>
    %375 = arith.extui %374 : vector<8x128xi1> to vector<8x128xi32>
    %376 = arith.sitofp %375 : vector<8x128xi32> to vector<8x128xf32>
    %c0_122 = arith.constant 0 : index
    %c5 = arith.constant 5 : index
    %c0_123 = arith.constant 0 : index
    %377 = vector.load %arg4[%c0_122, %c5, %c0_123] : memref<1x32x128xf32, #tpu.memory_space<vmem>>, vector<1x1x128xf32>
    %378 = vector.shape_cast %377 : vector<1x1x128xf32> to vector<1x128xf32>
    %cst_124 = arith.constant dense<0.000000e+00> : vector<128xf32>
    %379 = vector.multi_reduction <add>, %376, %cst_124 [0] : vector<8x128xf32> to vector<128xf32>
    %380 = vector.shape_cast %379 : vector<128xf32> to vector<1x128xf32>
    %381 = arith.addf %378, %380 : vector<1x128xf32>
    %c0_125 = arith.constant 0 : index
    %c5_126 = arith.constant 5 : index
    %c0_127 = arith.constant 0 : index
    %382 = vector.load %arg4[%c0_125, %c5_126, %c0_127] : memref<1x32x128xf32, #tpu.memory_space<vmem>>, vector<1x1x128xf32>
    %383 = vector.shape_cast %382 : vector<1x1x128xf32> to vector<1x128xf32>
    %384 = vector.shape_cast %381 : vector<1x128xf32> to vector<1x1x128xf32>
    tpu.vector_store %arg4[%c0_125, %c5_126, %c0_127], %384 {strides = array<i32>} : memref<1x32x128xf32, #tpu.memory_space<vmem>>, vector<1x1x128xf32>,
    %385 = vector.broadcast %66 : f32 to vector<8x128xf32>
    %386 = arith.mulf %254, %385 : vector<8x128xf32>
    %387 = vector.broadcast %69 : f32 to vector<8x128xf32>
    %388 = arith.mulf %258, %387 : vector<8x128xf32>
    %389 = arith.addf %386, %388 : vector<8x128xf32>
    %390 = vector.broadcast %72 : f32 to vector<8x128xf32>
    %391 = arith.subf %390, %256 : vector<8x128xf32>
    %392 = arith.addf %389, %391 : vector<8x128xf32>
    %393 = math.absf %392 : vector<8x128xf32>
    %cst_128 = arith.constant 1.000000e-01 : f32
    %394 = vector.broadcast %cst_128 : f32 to vector<8x128xf32>
    %395 = arith.cmpf olt, %393, %394 : vector<8x128xf32>
    %396 = arith.extui %395 : vector<8x128xi1> to vector<8x128xi32>
    %397 = arith.sitofp %396 : vector<8x128xi32> to vector<8x128xf32>
    %c0_129 = arith.constant 0 : index
    %c6 = arith.constant 6 : index
    %c0_130 = arith.constant 0 : index
    %398 = vector.load %arg4[%c0_129, %c6, %c0_130] : memref<1x32x128xf32, #tpu.memory_space<vmem>>, vector<1x1x128xf32>
    %399 = vector.shape_cast %398 : vector<1x1x128xf32> to vector<1x128xf32>
    %cst_131 = arith.constant dense<0.000000e+00> : vector<128xf32>
    %400 = vector.multi_reduction <add>, %397, %cst_131 [0] : vector<8x128xf32> to vector<128xf32>
    %401 = vector.shape_cast %400 : vector<128xf32> to vector<1x128xf32>
    %402 = arith.addf %399, %401 : vector<1x128xf32>
    %c0_132 = arith.constant 0 : index
    %c6_133 = arith.constant 6 : index
    %c0_134 = arith.constant 0 : index
    %403 = vector.load %arg4[%c0_132, %c6_133, %c0_134] : memref<1x32x128xf32, #tpu.memory_space<vmem>>, vector<1x1x128xf32>
    %404 = vector.shape_cast %403 : vector<1x1x128xf32> to vector<1x128xf32>
    %405 = vector.shape_cast %402 : vector<1x128xf32> to vector<1x1x128xf32>
    tpu.vector_store %arg4[%c0_132, %c6_133, %c0_134], %405 {strides = array<i32>} : memref<1x32x128xf32, #tpu.memory_space<vmem>>, vector<1x1x128xf32>,
    %406 = vector.broadcast %76 : f32 to vector<8x128xf32>
    %407 = arith.mulf %254, %406 : vector<8x128xf32>
    %408 = vector.broadcast %79 : f32 to vector<8x128xf32>
    %409 = arith.mulf %258, %408 : vector<8x128xf32>
    %410 = arith.addf %407, %409 : vector<8x128xf32>
    %411 = vector.broadcast %82 : f32 to vector<8x128xf32>
    %412 = arith.subf %411, %256 : vector<8x128xf32>
    %413 = arith.addf %410, %412 : vector<8x128xf32>
    %414 = math.absf %413 : vector<8x128xf32>
    %cst_135 = arith.constant 1.000000e-01 : f32
    %415 = vector.broadcast %cst_135 : f32 to vector<8x128xf32>
    %416 = arith.cmpf olt, %414, %415 : vector<8x128xf32>
    %417 = arith.extui %416 : vector<8x128xi1> to vector<8x128xi32>
    %418 = arith.sitofp %417 : vector<8x128xi32> to vector<8x128xf32>
    %c0_136 = arith.constant 0 : index
    %c7 = arith.constant 7 : index
    %c0_137 = arith.constant 0 : index
    %419 = vector.load %arg4[%c0_136, %c7, %c0_137] : memref<1x32x128xf32, #tpu.memory_space<vmem>>, vector<1x1x128xf32>
    %420 = vector.shape_cast %419 : vector<1x1x128xf32> to vector<1x128xf32>
    %cst_138 = arith.constant dense<0.000000e+00> : vector<128xf32>
    %421 = vector.multi_reduction <add>, %418, %cst_138 [0] : vector<8x128xf32> to vector<128xf32>
    %422 = vector.shape_cast %421 : vector<128xf32> to vector<1x128xf32>
    %423 = arith.addf %420, %422 : vector<1x128xf32>
    %c0_139 = arith.constant 0 : index
    %c7_140 = arith.constant 7 : index
    %c0_141 = arith.constant 0 : index
    %424 = vector.load %arg4[%c0_139, %c7_140, %c0_141] : memref<1x32x128xf32, #tpu.memory_space<vmem>>, vector<1x1x128xf32>
    %425 = vector.shape_cast %424 : vector<1x1x128xf32> to vector<1x128xf32>
    %426 = vector.shape_cast %423 : vector<1x128xf32> to vector<1x1x128xf32>
    tpu.vector_store %arg4[%c0_139, %c7_140, %c0_141], %426 {strides = array<i32>} : memref<1x32x128xf32, #tpu.memory_space<vmem>>, vector<1x1x128xf32>,
    %427 = vector.broadcast %86 : f32 to vector<8x128xf32>
    %428 = arith.mulf %254, %427 : vector<8x128xf32>
    %429 = vector.broadcast %89 : f32 to vector<8x128xf32>
    %430 = arith.mulf %258, %429 : vector<8x128xf32>
    %431 = arith.addf %428, %430 : vector<8x128xf32>
    %432 = vector.broadcast %92 : f32 to vector<8x128xf32>
    %433 = arith.subf %432, %256 : vector<8x128xf32>
    %434 = arith.addf %431, %433 : vector<8x128xf32>
    %435 = math.absf %434 : vector<8x128xf32>
    %cst_142 = arith.constant 1.000000e-01 : f32
    %436 = vector.broadcast %cst_142 : f32 to vector<8x128xf32>
    %437 = arith.cmpf olt, %435, %436 : vector<8x128xf32>
    %438 = arith.extui %437 : vector<8x128xi1> to vector<8x128xi32>
    %439 = arith.sitofp %438 : vector<8x128xi32> to vector<8x128xf32>
    %c0_143 = arith.constant 0 : index
    %c8 = arith.constant 8 : index
    %c0_144 = arith.constant 0 : index
    %440 = vector.load %arg4[%c0_143, %c8, %c0_144] : memref<1x32x128xf32, #tpu.memory_space<vmem>>, vector<1x1x128xf32>
    %441 = vector.shape_cast %440 : vector<1x1x128xf32> to vector<1x128xf32>
    %cst_145 = arith.constant dense<0.000000e+00> : vector<128xf32>
    %442 = vector.multi_reduction <add>, %439, %cst_145 [0] : vector<8x128xf32> to vector<128xf32>
    %443 = vector.shape_cast %442 : vector<128xf32> to vector<1x128xf32>
    %444 = arith.addf %441, %443 : vector<1x128xf32>
    %c0_146 = arith.constant 0 : index
    %c8_147 = arith.constant 8 : index
    %c0_148 = arith.constant 0 : index
    %445 = vector.load %arg4[%c0_146, %c8_147, %c0_148] : memref<1x32x128xf32, #tpu.memory_space<vmem>>, vector<1x1x128xf32>
    %446 = vector.shape_cast %445 : vector<1x1x128xf32> to vector<1x128xf32>
    %447 = vector.shape_cast %444 : vector<1x128xf32> to vector<1x1x128xf32>
    tpu.vector_store %arg4[%c0_146, %c8_147, %c0_148], %447 {strides = array<i32>} : memref<1x32x128xf32, #tpu.memory_space<vmem>>, vector<1x1x128xf32>,
    %448 = vector.broadcast %96 : f32 to vector<8x128xf32>
    %449 = arith.mulf %254, %448 : vector<8x128xf32>
    %450 = vector.broadcast %99 : f32 to vector<8x128xf32>
    %451 = arith.mulf %258, %450 : vector<8x128xf32>
    %452 = arith.addf %449, %451 : vector<8x128xf32>
    %453 = vector.broadcast %102 : f32 to vector<8x128xf32>
    %454 = arith.subf %453, %256 : vector<8x128xf32>
    %455 = arith.addf %452, %454 : vector<8x128xf32>
    %456 = math.absf %455 : vector<8x128xf32>
    %cst_149 = arith.constant 1.000000e-01 : f32
    %457 = vector.broadcast %cst_149 : f32 to vector<8x128xf32>
    %458 = arith.cmpf olt, %456, %457 : vector<8x128xf32>
    %459 = arith.extui %458 : vector<8x128xi1> to vector<8x128xi32>
    %460 = arith.sitofp %459 : vector<8x128xi32> to vector<8x128xf32>
    %c0_150 = arith.constant 0 : index
    %c9 = arith.constant 9 : index
    %c0_151 = arith.constant 0 : index
    %461 = vector.load %arg4[%c0_150, %c9, %c0_151] : memref<1x32x128xf32, #tpu.memory_space<vmem>>, vector<1x1x128xf32>
    %462 = vector.shape_cast %461 : vector<1x1x128xf32> to vector<1x128xf32>
    %cst_152 = arith.constant dense<0.000000e+00> : vector<128xf32>
    %463 = vector.multi_reduction <add>, %460, %cst_152 [0] : vector<8x128xf32> to vector<128xf32>
    %464 = vector.shape_cast %463 : vector<128xf32> to vector<1x128xf32>
    %465 = arith.addf %462, %464 : vector<1x128xf32>
    %c0_153 = arith.constant 0 : index
    %c9_154 = arith.constant 9 : index
    %c0_155 = arith.constant 0 : index
    %466 = vector.load %arg4[%c0_153, %c9_154, %c0_155] : memref<1x32x128xf32, #tpu.memory_space<vmem>>, vector<1x1x128xf32>
    %467 = vector.shape_cast %466 : vector<1x1x128xf32> to vector<1x128xf32>
    %468 = vector.shape_cast %465 : vector<1x128xf32> to vector<1x1x128xf32>
    tpu.vector_store %arg4[%c0_153, %c9_154, %c0_155], %468 {strides = array<i32>} : memref<1x32x128xf32, #tpu.memory_space<vmem>>, vector<1x1x128xf32>,
    %469 = vector.broadcast %106 : f32 to vector<8x128xf32>
    %470 = arith.mulf %254, %469 : vector<8x128xf32>
    %471 = vector.broadcast %109 : f32 to vector<8x128xf32>
    %472 = arith.mulf %258, %471 : vector<8x128xf32>
    %473 = arith.addf %470, %472 : vector<8x128xf32>
    %474 = vector.broadcast %112 : f32 to vector<8x128xf32>
    %475 = arith.subf %474, %256 : vector<8x128xf32>
    %476 = arith.addf %473, %475 : vector<8x128xf32>
    %477 = math.absf %476 : vector<8x128xf32>
    %cst_156 = arith.constant 1.000000e-01 : f32
    %478 = vector.broadcast %cst_156 : f32 to vector<8x128xf32>
    %479 = arith.cmpf olt, %477, %478 : vector<8x128xf32>
    %480 = arith.extui %479 : vector<8x128xi1> to vector<8x128xi32>
    %481 = arith.sitofp %480 : vector<8x128xi32> to vector<8x128xf32>
    %c0_157 = arith.constant 0 : index
    %c10 = arith.constant 10 : index
    %c0_158 = arith.constant 0 : index
    %482 = vector.load %arg4[%c0_157, %c10, %c0_158] : memref<1x32x128xf32, #tpu.memory_space<vmem>>, vector<1x1x128xf32>
    %483 = vector.shape_cast %482 : vector<1x1x128xf32> to vector<1x128xf32>
    %cst_159 = arith.constant dense<0.000000e+00> : vector<128xf32>
    %484 = vector.multi_reduction <add>, %481, %cst_159 [0] : vector<8x128xf32> to vector<128xf32>
    %485 = vector.shape_cast %484 : vector<128xf32> to vector<1x128xf32>
    %486 = arith.addf %483, %485 : vector<1x128xf32>
    %c0_160 = arith.constant 0 : index
    %c10_161 = arith.constant 10 : index
    %c0_162 = arith.constant 0 : index
    %487 = vector.load %arg4[%c0_160, %c10_161, %c0_162] : memref<1x32x128xf32, #tpu.memory_space<vmem>>, vector<1x1x128xf32>
    %488 = vector.shape_cast %487 : vector<1x1x128xf32> to vector<1x128xf32>
    %489 = vector.shape_cast %486 : vector<1x128xf32> to vector<1x1x128xf32>
    tpu.vector_store %arg4[%c0_160, %c10_161, %c0_162], %489 {strides = array<i32>} : memref<1x32x128xf32, #tpu.memory_space<vmem>>, vector<1x1x128xf32>,
    %490 = vector.broadcast %116 : f32 to vector<8x128xf32>
    %491 = arith.mulf %254, %490 : vector<8x128xf32>
    %492 = vector.broadcast %119 : f32 to vector<8x128xf32>
    %493 = arith.mulf %258, %492 : vector<8x128xf32>
    %494 = arith.addf %491, %493 : vector<8x128xf32>
    %495 = vector.broadcast %122 : f32 to vector<8x128xf32>
    %496 = arith.subf %495, %256 : vector<8x128xf32>
    %497 = arith.addf %494, %496 : vector<8x128xf32>
    %498 = math.absf %497 : vector<8x128xf32>
    %cst_163 = arith.constant 1.000000e-01 : f32
    %499 = vector.broadcast %cst_163 : f32 to vector<8x128xf32>
    %500 = arith.cmpf olt, %498, %499 : vector<8x128xf32>
    %501 = arith.extui %500 : vector<8x128xi1> to vector<8x128xi32>
    %502 = arith.sitofp %501 : vector<8x128xi32> to vector<8x128xf32>
    %c0_164 = arith.constant 0 : index
    %c11 = arith.constant 11 : index
    %c0_165 = arith.constant 0 : index
    %503 = vector.load %arg4[%c0_164, %c11, %c0_165] : memref<1x32x128xf32, #tpu.memory_space<vmem>>, vector<1x1x128xf32>
    %504 = vector.shape_cast %503 : vector<1x1x128xf32> to vector<1x128xf32>
    %cst_166 = arith.constant dense<0.000000e+00> : vector<128xf32>
    %505 = vector.multi_reduction <add>, %502, %cst_166 [0] : vector<8x128xf32> to vector<128xf32>
    %506 = vector.shape_cast %505 : vector<128xf32> to vector<1x128xf32>
    %507 = arith.addf %504, %506 : vector<1x128xf32>
    %c0_167 = arith.constant 0 : index
    %c11_168 = arith.constant 11 : index
    %c0_169 = arith.constant 0 : index
    %508 = vector.load %arg4[%c0_167, %c11_168, %c0_169] : memref<1x32x128xf32, #tpu.memory_space<vmem>>, vector<1x1x128xf32>
    %509 = vector.shape_cast %508 : vector<1x1x128xf32> to vector<1x128xf32>
    %510 = vector.shape_cast %507 : vector<1x128xf32> to vector<1x1x128xf32>
    tpu.vector_store %arg4[%c0_167, %c11_168, %c0_169], %510 {strides = array<i32>} : memref<1x32x128xf32, #tpu.memory_space<vmem>>, vector<1x1x128xf32>,
    %511 = vector.broadcast %126 : f32 to vector<8x128xf32>
    %512 = arith.mulf %254, %511 : vector<8x128xf32>
    %513 = vector.broadcast %129 : f32 to vector<8x128xf32>
    %514 = arith.mulf %258, %513 : vector<8x128xf32>
    %515 = arith.addf %512, %514 : vector<8x128xf32>
    %516 = vector.broadcast %132 : f32 to vector<8x128xf32>
    %517 = arith.subf %516, %256 : vector<8x128xf32>
    %518 = arith.addf %515, %517 : vector<8x128xf32>
    %519 = math.absf %518 : vector<8x128xf32>
    %cst_170 = arith.constant 1.000000e-01 : f32
    %520 = vector.broadcast %cst_170 : f32 to vector<8x128xf32>
    %521 = arith.cmpf olt, %519, %520 : vector<8x128xf32>
    %522 = arith.extui %521 : vector<8x128xi1> to vector<8x128xi32>
    %523 = arith.sitofp %522 : vector<8x128xi32> to vector<8x128xf32>
    %c0_171 = arith.constant 0 : index
    %c12 = arith.constant 12 : index
    %c0_172 = arith.constant 0 : index
    %524 = vector.load %arg4[%c0_171, %c12, %c0_172] : memref<1x32x128xf32, #tpu.memory_space<vmem>>, vector<1x1x128xf32>
    %525 = vector.shape_cast %524 : vector<1x1x128xf32> to vector<1x128xf32>
    %cst_173 = arith.constant dense<0.000000e+00> : vector<128xf32>
    %526 = vector.multi_reduction <add>, %523, %cst_173 [0] : vector<8x128xf32> to vector<128xf32>
    %527 = vector.shape_cast %526 : vector<128xf32> to vector<1x128xf32>
    %528 = arith.addf %525, %527 : vector<1x128xf32>
    %c0_174 = arith.constant 0 : index
    %c12_175 = arith.constant 12 : index
    %c0_176 = arith.constant 0 : index
    %529 = vector.load %arg4[%c0_174, %c12_175, %c0_176] : memref<1x32x128xf32, #tpu.memory_space<vmem>>, vector<1x1x128xf32>
    %530 = vector.shape_cast %529 : vector<1x1x128xf32> to vector<1x128xf32>
    %531 = vector.shape_cast %528 : vector<1x128xf32> to vector<1x1x128xf32>
    tpu.vector_store %arg4[%c0_174, %c12_175, %c0_176], %531 {strides = array<i32>} : memref<1x32x128xf32, #tpu.memory_space<vmem>>, vector<1x1x128xf32>,
    %532 = vector.broadcast %136 : f32 to vector<8x128xf32>
    %533 = arith.mulf %254, %532 : vector<8x128xf32>
    %534 = vector.broadcast %139 : f32 to vector<8x128xf32>
    %535 = arith.mulf %258, %534 : vector<8x128xf32>
    %536 = arith.addf %533, %535 : vector<8x128xf32>
    %537 = vector.broadcast %142 : f32 to vector<8x128xf32>
    %538 = arith.subf %537, %256 : vector<8x128xf32>
    %539 = arith.addf %536, %538 : vector<8x128xf32>
    %540 = math.absf %539 : vector<8x128xf32>
    %cst_177 = arith.constant 1.000000e-01 : f32
    %541 = vector.broadcast %cst_177 : f32 to vector<8x128xf32>
    %542 = arith.cmpf olt, %540, %541 : vector<8x128xf32>
    %543 = arith.extui %542 : vector<8x128xi1> to vector<8x128xi32>
    %544 = arith.sitofp %543 : vector<8x128xi32> to vector<8x128xf32>
    %c0_178 = arith.constant 0 : index
    %c13 = arith.constant 13 : index
    %c0_179 = arith.constant 0 : index
    %545 = vector.load %arg4[%c0_178, %c13, %c0_179] : memref<1x32x128xf32, #tpu.memory_space<vmem>>, vector<1x1x128xf32>
    %546 = vector.shape_cast %545 : vector<1x1x128xf32> to vector<1x128xf32>
    %cst_180 = arith.constant dense<0.000000e+00> : vector<128xf32>
    %547 = vector.multi_reduction <add>, %544, %cst_180 [0] : vector<8x128xf32> to vector<128xf32>
    %548 = vector.shape_cast %547 : vector<128xf32> to vector<1x128xf32>
    %549 = arith.addf %546, %548 : vector<1x128xf32>
    %c0_181 = arith.constant 0 : index
    %c13_182 = arith.constant 13 : index
    %c0_183 = arith.constant 0 : index
    %550 = vector.load %arg4[%c0_181, %c13_182, %c0_183] : memref<1x32x128xf32, #tpu.memory_space<vmem>>, vector<1x1x128xf32>
    %551 = vector.shape_cast %550 : vector<1x1x128xf32> to vector<1x128xf32>
    %552 = vector.shape_cast %549 : vector<1x128xf32> to vector<1x1x128xf32>
    tpu.vector_store %arg4[%c0_181, %c13_182, %c0_183], %552 {strides = array<i32>} : memref<1x32x128xf32, #tpu.memory_space<vmem>>, vector<1x1x128xf32>,
    %553 = vector.broadcast %146 : f32 to vector<8x128xf32>
    %554 = arith.mulf %254, %553 : vector<8x128xf32>
    %555 = vector.broadcast %149 : f32 to vector<8x128xf32>
    %556 = arith.mulf %258, %555 : vector<8x128xf32>
    %557 = arith.addf %554, %556 : vector<8x128xf32>
    %558 = vector.broadcast %152 : f32 to vector<8x128xf32>
    %559 = arith.subf %558, %256 : vector<8x128xf32>
    %560 = arith.addf %557, %559 : vector<8x128xf32>
    %561 = math.absf %560 : vector<8x128xf32>
    %cst_184 = arith.constant 1.000000e-01 : f32
    %562 = vector.broadcast %cst_184 : f32 to vector<8x128xf32>
    %563 = arith.cmpf olt, %561, %562 : vector<8x128xf32>
    %564 = arith.extui %563 : vector<8x128xi1> to vector<8x128xi32>
    %565 = arith.sitofp %564 : vector<8x128xi32> to vector<8x128xf32>
    %c0_185 = arith.constant 0 : index
    %c14 = arith.constant 14 : index
    %c0_186 = arith.constant 0 : index
    %566 = vector.load %arg4[%c0_185, %c14, %c0_186] : memref<1x32x128xf32, #tpu.memory_space<vmem>>, vector<1x1x128xf32>
    %567 = vector.shape_cast %566 : vector<1x1x128xf32> to vector<1x128xf32>
    %cst_187 = arith.constant dense<0.000000e+00> : vector<128xf32>
    %568 = vector.multi_reduction <add>, %565, %cst_187 [0] : vector<8x128xf32> to vector<128xf32>
    %569 = vector.shape_cast %568 : vector<128xf32> to vector<1x128xf32>
    %570 = arith.addf %567, %569 : vector<1x128xf32>
    %c0_188 = arith.constant 0 : index
    %c14_189 = arith.constant 14 : index
    %c0_190 = arith.constant 0 : index
    %571 = vector.load %arg4[%c0_188, %c14_189, %c0_190] : memref<1x32x128xf32, #tpu.memory_space<vmem>>, vector<1x1x128xf32>
    %572 = vector.shape_cast %571 : vector<1x1x128xf32> to vector<1x128xf32>
    %573 = vector.shape_cast %570 : vector<1x128xf32> to vector<1x1x128xf32>
    tpu.vector_store %arg4[%c0_188, %c14_189, %c0_190], %573 {strides = array<i32>} : memref<1x32x128xf32, #tpu.memory_space<vmem>>, vector<1x1x128xf32>,
    %574 = vector.broadcast %156 : f32 to vector<8x128xf32>
    %575 = arith.mulf %254, %574 : vector<8x128xf32>
    %576 = vector.broadcast %159 : f32 to vector<8x128xf32>
    %577 = arith.mulf %258, %576 : vector<8x128xf32>
    %578 = arith.addf %575, %577 : vector<8x128xf32>
    %579 = vector.broadcast %162 : f32 to vector<8x128xf32>
    %580 = arith.subf %579, %256 : vector<8x128xf32>
    %581 = arith.addf %578, %580 : vector<8x128xf32>
    %582 = math.absf %581 : vector<8x128xf32>
    %cst_191 = arith.constant 1.000000e-01 : f32
    %583 = vector.broadcast %cst_191 : f32 to vector<8x128xf32>
    %584 = arith.cmpf olt, %582, %583 : vector<8x128xf32>
    %585 = arith.extui %584 : vector<8x128xi1> to vector<8x128xi32>
    %586 = arith.sitofp %585 : vector<8x128xi32> to vector<8x128xf32>
    %c0_192 = arith.constant 0 : index
    %c15 = arith.constant 15 : index
    %c0_193 = arith.constant 0 : index
    %587 = vector.load %arg4[%c0_192, %c15, %c0_193] : memref<1x32x128xf32, #tpu.memory_space<vmem>>, vector<1x1x128xf32>
    %588 = vector.shape_cast %587 : vector<1x1x128xf32> to vector<1x128xf32>
    %cst_194 = arith.constant dense<0.000000e+00> : vector<128xf32>
    %589 = vector.multi_reduction <add>, %586, %cst_194 [0] : vector<8x128xf32> to vector<128xf32>
    %590 = vector.shape_cast %589 : vector<128xf32> to vector<1x128xf32>
    %591 = arith.addf %588, %590 : vector<1x128xf32>
    %c0_195 = arith.constant 0 : index
    %c15_196 = arith.constant 15 : index
    %c0_197 = arith.constant 0 : index
    %592 = vector.load %arg4[%c0_195, %c15_196, %c0_197] : memref<1x32x128xf32, #tpu.memory_space<vmem>>, vector<1x1x128xf32>
    %593 = vector.shape_cast %592 : vector<1x1x128xf32> to vector<1x128xf32>
    %594 = vector.shape_cast %591 : vector<1x128xf32> to vector<1x1x128xf32>
    tpu.vector_store %arg4[%c0_195, %c15_196, %c0_197], %594 {strides = array<i32>} : memref<1x32x128xf32, #tpu.memory_space<vmem>>, vector<1x1x128xf32>,
    %595 = vector.broadcast %166 : f32 to vector<8x128xf32>
    %596 = arith.mulf %254, %595 : vector<8x128xf32>
    %597 = vector.broadcast %169 : f32 to vector<8x128xf32>
    %598 = arith.mulf %258, %597 : vector<8x128xf32>
    %599 = arith.addf %596, %598 : vector<8x128xf32>
    %600 = vector.broadcast %172 : f32 to vector<8x128xf32>
    %601 = arith.subf %600, %256 : vector<8x128xf32>
    %602 = arith.addf %599, %601 : vector<8x128xf32>
    %603 = math.absf %602 : vector<8x128xf32>
    %cst_198 = arith.constant 1.000000e-01 : f32
    %604 = vector.broadcast %cst_198 : f32 to vector<8x128xf32>
    %605 = arith.cmpf olt, %603, %604 : vector<8x128xf32>
    %606 = arith.extui %605 : vector<8x128xi1> to vector<8x128xi32>
    %607 = arith.sitofp %606 : vector<8x128xi32> to vector<8x128xf32>
    %c0_199 = arith.constant 0 : index
    %c16 = arith.constant 16 : index
    %c0_200 = arith.constant 0 : index
    %608 = vector.load %arg4[%c0_199, %c16, %c0_200] : memref<1x32x128xf32, #tpu.memory_space<vmem>>, vector<1x1x128xf32>
    %609 = vector.shape_cast %608 : vector<1x1x128xf32> to vector<1x128xf32>
    %cst_201 = arith.constant dense<0.000000e+00> : vector<128xf32>
    %610 = vector.multi_reduction <add>, %607, %cst_201 [0] : vector<8x128xf32> to vector<128xf32>
    %611 = vector.shape_cast %610 : vector<128xf32> to vector<1x128xf32>
    %612 = arith.addf %609, %611 : vector<1x128xf32>
    %c0_202 = arith.constant 0 : index
    %c16_203 = arith.constant 16 : index
    %c0_204 = arith.constant 0 : index
    %613 = vector.load %arg4[%c0_202, %c16_203, %c0_204] : memref<1x32x128xf32, #tpu.memory_space<vmem>>, vector<1x1x128xf32>
    %614 = vector.shape_cast %613 : vector<1x1x128xf32> to vector<1x128xf32>
    %615 = vector.shape_cast %612 : vector<1x128xf32> to vector<1x1x128xf32>
    tpu.vector_store %arg4[%c0_202, %c16_203, %c0_204], %615 {strides = array<i32>} : memref<1x32x128xf32, #tpu.memory_space<vmem>>, vector<1x1x128xf32>,
    %616 = vector.broadcast %176 : f32 to vector<8x128xf32>
    %617 = arith.mulf %254, %616 : vector<8x128xf32>
    %618 = vector.broadcast %179 : f32 to vector<8x128xf32>
    %619 = arith.mulf %258, %618 : vector<8x128xf32>
    %620 = arith.addf %617, %619 : vector<8x128xf32>
    %621 = vector.broadcast %182 : f32 to vector<8x128xf32>
    %622 = arith.subf %621, %256 : vector<8x128xf32>
    %623 = arith.addf %620, %622 : vector<8x128xf32>
    %624 = math.absf %623 : vector<8x128xf32>
    %cst_205 = arith.constant 1.000000e-01 : f32
    %625 = vector.broadcast %cst_205 : f32 to vector<8x128xf32>
    %626 = arith.cmpf olt, %624, %625 : vector<8x128xf32>
    %627 = arith.extui %626 : vector<8x128xi1> to vector<8x128xi32>
    %628 = arith.sitofp %627 : vector<8x128xi32> to vector<8x128xf32>
    %c0_206 = arith.constant 0 : index
    %c17 = arith.constant 17 : index
    %c0_207 = arith.constant 0 : index
    %629 = vector.load %arg4[%c0_206, %c17, %c0_207] : memref<1x32x128xf32, #tpu.memory_space<vmem>>, vector<1x1x128xf32>
    %630 = vector.shape_cast %629 : vector<1x1x128xf32> to vector<1x128xf32>
    %cst_208 = arith.constant dense<0.000000e+00> : vector<128xf32>
    %631 = vector.multi_reduction <add>, %628, %cst_208 [0] : vector<8x128xf32> to vector<128xf32>
    %632 = vector.shape_cast %631 : vector<128xf32> to vector<1x128xf32>
    %633 = arith.addf %630, %632 : vector<1x128xf32>
    %c0_209 = arith.constant 0 : index
    %c17_210 = arith.constant 17 : index
    %c0_211 = arith.constant 0 : index
    %634 = vector.load %arg4[%c0_209, %c17_210, %c0_211] : memref<1x32x128xf32, #tpu.memory_space<vmem>>, vector<1x1x128xf32>
    %635 = vector.shape_cast %634 : vector<1x1x128xf32> to vector<1x128xf32>
    %636 = vector.shape_cast %633 : vector<1x128xf32> to vector<1x1x128xf32>
    tpu.vector_store %arg4[%c0_209, %c17_210, %c0_211], %636 {strides = array<i32>} : memref<1x32x128xf32, #tpu.memory_space<vmem>>, vector<1x1x128xf32>,
    %637 = vector.broadcast %186 : f32 to vector<8x128xf32>
    %638 = arith.mulf %254, %637 : vector<8x128xf32>
    %639 = vector.broadcast %189 : f32 to vector<8x128xf32>
    %640 = arith.mulf %258, %639 : vector<8x128xf32>
    %641 = arith.addf %638, %640 : vector<8x128xf32>
    %642 = vector.broadcast %192 : f32 to vector<8x128xf32>
    %643 = arith.subf %642, %256 : vector<8x128xf32>
    %644 = arith.addf %641, %643 : vector<8x128xf32>
    %645 = math.absf %644 : vector<8x128xf32>
    %cst_212 = arith.constant 1.000000e-01 : f32
    %646 = vector.broadcast %cst_212 : f32 to vector<8x128xf32>
    %647 = arith.cmpf olt, %645, %646 : vector<8x128xf32>
    %648 = arith.extui %647 : vector<8x128xi1> to vector<8x128xi32>
    %649 = arith.sitofp %648 : vector<8x128xi32> to vector<8x128xf32>
    %c0_213 = arith.constant 0 : index
    %c18 = arith.constant 18 : index
    %c0_214 = arith.constant 0 : index
    %650 = vector.load %arg4[%c0_213, %c18, %c0_214] : memref<1x32x128xf32, #tpu.memory_space<vmem>>, vector<1x1x128xf32>
    %651 = vector.shape_cast %650 : vector<1x1x128xf32> to vector<1x128xf32>
    %cst_215 = arith.constant dense<0.000000e+00> : vector<128xf32>
    %652 = vector.multi_reduction <add>, %649, %cst_215 [0] : vector<8x128xf32> to vector<128xf32>
    %653 = vector.shape_cast %652 : vector<128xf32> to vector<1x128xf32>
    %654 = arith.addf %651, %653 : vector<1x128xf32>
    %c0_216 = arith.constant 0 : index
    %c18_217 = arith.constant 18 : index
    %c0_218 = arith.constant 0 : index
    %655 = vector.load %arg4[%c0_216, %c18_217, %c0_218] : memref<1x32x128xf32, #tpu.memory_space<vmem>>, vector<1x1x128xf32>
    %656 = vector.shape_cast %655 : vector<1x1x128xf32> to vector<1x128xf32>
    %657 = vector.shape_cast %654 : vector<1x128xf32> to vector<1x1x128xf32>
    tpu.vector_store %arg4[%c0_216, %c18_217, %c0_218], %657 {strides = array<i32>} : memref<1x32x128xf32, #tpu.memory_space<vmem>>, vector<1x1x128xf32>,
    %658 = vector.broadcast %196 : f32 to vector<8x128xf32>
    %659 = arith.mulf %254, %658 : vector<8x128xf32>
    %660 = vector.broadcast %199 : f32 to vector<8x128xf32>
    %661 = arith.mulf %258, %660 : vector<8x128xf32>
    %662 = arith.addf %659, %661 : vector<8x128xf32>
    %663 = vector.broadcast %202 : f32 to vector<8x128xf32>
    %664 = arith.subf %663, %256 : vector<8x128xf32>
    %665 = arith.addf %662, %664 : vector<8x128xf32>
    %666 = math.absf %665 : vector<8x128xf32>
    %cst_219 = arith.constant 1.000000e-01 : f32
    %667 = vector.broadcast %cst_219 : f32 to vector<8x128xf32>
    %668 = arith.cmpf olt, %666, %667 : vector<8x128xf32>
    %669 = arith.extui %668 : vector<8x128xi1> to vector<8x128xi32>
    %670 = arith.sitofp %669 : vector<8x128xi32> to vector<8x128xf32>
    %c0_220 = arith.constant 0 : index
    %c19 = arith.constant 19 : index
    %c0_221 = arith.constant 0 : index
    %671 = vector.load %arg4[%c0_220, %c19, %c0_221] : memref<1x32x128xf32, #tpu.memory_space<vmem>>, vector<1x1x128xf32>
    %672 = vector.shape_cast %671 : vector<1x1x128xf32> to vector<1x128xf32>
    %cst_222 = arith.constant dense<0.000000e+00> : vector<128xf32>
    %673 = vector.multi_reduction <add>, %670, %cst_222 [0] : vector<8x128xf32> to vector<128xf32>
    %674 = vector.shape_cast %673 : vector<128xf32> to vector<1x128xf32>
    %675 = arith.addf %672, %674 : vector<1x128xf32>
    %c0_223 = arith.constant 0 : index
    %c19_224 = arith.constant 19 : index
    %c0_225 = arith.constant 0 : index
    %676 = vector.load %arg4[%c0_223, %c19_224, %c0_225] : memref<1x32x128xf32, #tpu.memory_space<vmem>>, vector<1x1x128xf32>
    %677 = vector.shape_cast %676 : vector<1x1x128xf32> to vector<1x128xf32>
    %678 = vector.shape_cast %675 : vector<1x128xf32> to vector<1x1x128xf32>
    tpu.vector_store %arg4[%c0_223, %c19_224, %c0_225], %678 {strides = array<i32>} : memref<1x32x128xf32, #tpu.memory_space<vmem>>, vector<1x1x128xf32>,
    %679 = vector.broadcast %206 : f32 to vector<8x128xf32>
    %680 = arith.mulf %254, %679 : vector<8x128xf32>
    %681 = vector.broadcast %209 : f32 to vector<8x128xf32>
    %682 = arith.mulf %258, %681 : vector<8x128xf32>
    %683 = arith.addf %680, %682 : vector<8x128xf32>
    %684 = vector.broadcast %212 : f32 to vector<8x128xf32>
    %685 = arith.subf %684, %256 : vector<8x128xf32>
    %686 = arith.addf %683, %685 : vector<8x128xf32>
    %687 = math.absf %686 : vector<8x128xf32>
    %cst_226 = arith.constant 1.000000e-01 : f32
    %688 = vector.broadcast %cst_226 : f32 to vector<8x128xf32>
    %689 = arith.cmpf olt, %687, %688 : vector<8x128xf32>
    %690 = arith.extui %689 : vector<8x128xi1> to vector<8x128xi32>
    %691 = arith.sitofp %690 : vector<8x128xi32> to vector<8x128xf32>
    %c0_227 = arith.constant 0 : index
    %c20 = arith.constant 20 : index
    %c0_228 = arith.constant 0 : index
    %692 = vector.load %arg4[%c0_227, %c20, %c0_228] : memref<1x32x128xf32, #tpu.memory_space<vmem>>, vector<1x1x128xf32>
    %693 = vector.shape_cast %692 : vector<1x1x128xf32> to vector<1x128xf32>
    %cst_229 = arith.constant dense<0.000000e+00> : vector<128xf32>
    %694 = vector.multi_reduction <add>, %691, %cst_229 [0] : vector<8x128xf32> to vector<128xf32>
    %695 = vector.shape_cast %694 : vector<128xf32> to vector<1x128xf32>
    %696 = arith.addf %693, %695 : vector<1x128xf32>
    %c0_230 = arith.constant 0 : index
    %c20_231 = arith.constant 20 : index
    %c0_232 = arith.constant 0 : index
    %697 = vector.load %arg4[%c0_230, %c20_231, %c0_232] : memref<1x32x128xf32, #tpu.memory_space<vmem>>, vector<1x1x128xf32>
    %698 = vector.shape_cast %697 : vector<1x1x128xf32> to vector<1x128xf32>
    %699 = vector.shape_cast %696 : vector<1x128xf32> to vector<1x1x128xf32>
    tpu.vector_store %arg4[%c0_230, %c20_231, %c0_232], %699 {strides = array<i32>} : memref<1x32x128xf32, #tpu.memory_space<vmem>>, vector<1x1x128xf32>,
    %700 = vector.broadcast %216 : f32 to vector<8x128xf32>
    %701 = arith.mulf %254, %700 : vector<8x128xf32>
    %702 = vector.broadcast %219 : f32 to vector<8x128xf32>
    %703 = arith.mulf %258, %702 : vector<8x128xf32>
    %704 = arith.addf %701, %703 : vector<8x128xf32>
    %705 = vector.broadcast %222 : f32 to vector<8x128xf32>
    %706 = arith.subf %705, %256 : vector<8x128xf32>
    %707 = arith.addf %704, %706 : vector<8x128xf32>
    %708 = math.absf %707 : vector<8x128xf32>
    %cst_233 = arith.constant 1.000000e-01 : f32
    %709 = vector.broadcast %cst_233 : f32 to vector<8x128xf32>
    %710 = arith.cmpf olt, %708, %709 : vector<8x128xf32>
    %711 = arith.extui %710 : vector<8x128xi1> to vector<8x128xi32>
    %712 = arith.sitofp %711 : vector<8x128xi32> to vector<8x128xf32>
    %c0_234 = arith.constant 0 : index
    %c21 = arith.constant 21 : index
    %c0_235 = arith.constant 0 : index
    %713 = vector.load %arg4[%c0_234, %c21, %c0_235] : memref<1x32x128xf32, #tpu.memory_space<vmem>>, vector<1x1x128xf32>
    %714 = vector.shape_cast %713 : vector<1x1x128xf32> to vector<1x128xf32>
    %cst_236 = arith.constant dense<0.000000e+00> : vector<128xf32>
    %715 = vector.multi_reduction <add>, %712, %cst_236 [0] : vector<8x128xf32> to vector<128xf32>
    %716 = vector.shape_cast %715 : vector<128xf32> to vector<1x128xf32>
    %717 = arith.addf %714, %716 : vector<1x128xf32>
    %c0_237 = arith.constant 0 : index
    %c21_238 = arith.constant 21 : index
    %c0_239 = arith.constant 0 : index
    %718 = vector.load %arg4[%c0_237, %c21_238, %c0_239] : memref<1x32x128xf32, #tpu.memory_space<vmem>>, vector<1x1x128xf32>
    %719 = vector.shape_cast %718 : vector<1x1x128xf32> to vector<1x128xf32>
    %720 = vector.shape_cast %717 : vector<1x128xf32> to vector<1x1x128xf32>
    tpu.vector_store %arg4[%c0_237, %c21_238, %c0_239], %720 {strides = array<i32>} : memref<1x32x128xf32, #tpu.memory_space<vmem>>, vector<1x1x128xf32>,
    %721 = vector.broadcast %226 : f32 to vector<8x128xf32>
    %722 = arith.mulf %254, %721 : vector<8x128xf32>
    %723 = vector.broadcast %229 : f32 to vector<8x128xf32>
    %724 = arith.mulf %258, %723 : vector<8x128xf32>
    %725 = arith.addf %722, %724 : vector<8x128xf32>
    %726 = vector.broadcast %232 : f32 to vector<8x128xf32>
    %727 = arith.subf %726, %256 : vector<8x128xf32>
    %728 = arith.addf %725, %727 : vector<8x128xf32>
    %729 = math.absf %728 : vector<8x128xf32>
    %cst_240 = arith.constant 1.000000e-01 : f32
    %730 = vector.broadcast %cst_240 : f32 to vector<8x128xf32>
    %731 = arith.cmpf olt, %729, %730 : vector<8x128xf32>
    %732 = arith.extui %731 : vector<8x128xi1> to vector<8x128xi32>
    %733 = arith.sitofp %732 : vector<8x128xi32> to vector<8x128xf32>
    %c0_241 = arith.constant 0 : index
    %c22 = arith.constant 22 : index
    %c0_242 = arith.constant 0 : index
    %734 = vector.load %arg4[%c0_241, %c22, %c0_242] : memref<1x32x128xf32, #tpu.memory_space<vmem>>, vector<1x1x128xf32>
    %735 = vector.shape_cast %734 : vector<1x1x128xf32> to vector<1x128xf32>
    %cst_243 = arith.constant dense<0.000000e+00> : vector<128xf32>
    %736 = vector.multi_reduction <add>, %733, %cst_243 [0] : vector<8x128xf32> to vector<128xf32>
    %737 = vector.shape_cast %736 : vector<128xf32> to vector<1x128xf32>
    %738 = arith.addf %735, %737 : vector<1x128xf32>
    %c0_244 = arith.constant 0 : index
    %c22_245 = arith.constant 22 : index
    %c0_246 = arith.constant 0 : index
    %739 = vector.load %arg4[%c0_244, %c22_245, %c0_246] : memref<1x32x128xf32, #tpu.memory_space<vmem>>, vector<1x1x128xf32>
    %740 = vector.shape_cast %739 : vector<1x1x128xf32> to vector<1x128xf32>
    %741 = vector.shape_cast %738 : vector<1x128xf32> to vector<1x1x128xf32>
    tpu.vector_store %arg4[%c0_244, %c22_245, %c0_246], %741 {strides = array<i32>} : memref<1x32x128xf32, #tpu.memory_space<vmem>>, vector<1x1x128xf32>,
    %742 = vector.broadcast %236 : f32 to vector<8x128xf32>
    %743 = arith.mulf %254, %742 : vector<8x128xf32>
    %744 = vector.broadcast %239 : f32 to vector<8x128xf32>
    %745 = arith.mulf %258, %744 : vector<8x128xf32>
    %746 = arith.addf %743, %745 : vector<8x128xf32>
    %747 = vector.broadcast %242 : f32 to vector<8x128xf32>
    %748 = arith.subf %747, %256 : vector<8x128xf32>
    %749 = arith.addf %746, %748 : vector<8x128xf32>
    %750 = math.absf %749 : vector<8x128xf32>
    %cst_247 = arith.constant 1.000000e-01 : f32
    %751 = vector.broadcast %cst_247 : f32 to vector<8x128xf32>
    %752 = arith.cmpf olt, %750, %751 : vector<8x128xf32>
    %753 = arith.extui %752 : vector<8x128xi1> to vector<8x128xi32>
    %754 = arith.sitofp %753 : vector<8x128xi32> to vector<8x128xf32>
    %c0_248 = arith.constant 0 : index
    %c23 = arith.constant 23 : index
    %c0_249 = arith.constant 0 : index
    %755 = vector.load %arg4[%c0_248, %c23, %c0_249] : memref<1x32x128xf32, #tpu.memory_space<vmem>>, vector<1x1x128xf32>
    %756 = vector.shape_cast %755 : vector<1x1x128xf32> to vector<1x128xf32>
    %cst_250 = arith.constant dense<0.000000e+00> : vector<128xf32>
    %757 = vector.multi_reduction <add>, %754, %cst_250 [0] : vector<8x128xf32> to vector<128xf32>
    %758 = vector.shape_cast %757 : vector<128xf32> to vector<1x128xf32>
    %759 = arith.addf %756, %758 : vector<1x128xf32>
    %c0_251 = arith.constant 0 : index
    %c23_252 = arith.constant 23 : index
    %c0_253 = arith.constant 0 : index
    %760 = vector.load %arg4[%c0_251, %c23_252, %c0_253] : memref<1x32x128xf32, #tpu.memory_space<vmem>>, vector<1x1x128xf32>
    %761 = vector.shape_cast %760 : vector<1x1x128xf32> to vector<1x128xf32>
    %762 = vector.shape_cast %759 : vector<1x128xf32> to vector<1x1x128xf32>
    tpu.vector_store %arg4[%c0_251, %c23_252, %c0_253], %762 {strides = array<i32>} : memref<1x32x128xf32, #tpu.memory_space<vmem>>, vector<1x1x128xf32>,
    %763 = vector.broadcast %246 : f32 to vector<8x128xf32>
    %764 = arith.mulf %254, %763 : vector<8x128xf32>
    %765 = vector.broadcast %249 : f32 to vector<8x128xf32>
    %766 = arith.mulf %258, %765 : vector<8x128xf32>
    %767 = arith.addf %764, %766 : vector<8x128xf32>
    %768 = vector.broadcast %252 : f32 to vector<8x128xf32>
    %769 = arith.subf %768, %256 : vector<8x128xf32>
    %770 = arith.addf %767, %769 : vector<8x128xf32>
    %771 = math.absf %770 : vector<8x128xf32>
    %cst_254 = arith.constant 1.000000e-01 : f32
    %772 = vector.broadcast %cst_254 : f32 to vector<8x128xf32>
    %773 = arith.cmpf olt, %771, %772 : vector<8x128xf32>
    %774 = arith.extui %773 : vector<8x128xi1> to vector<8x128xi32>
    %775 = arith.sitofp %774 : vector<8x128xi32> to vector<8x128xf32>
    %c0_255 = arith.constant 0 : index
    %c24 = arith.constant 24 : index
    %c0_256 = arith.constant 0 : index
    %776 = vector.load %arg4[%c0_255, %c24, %c0_256] : memref<1x32x128xf32, #tpu.memory_space<vmem>>, vector<1x1x128xf32>
    %777 = vector.shape_cast %776 : vector<1x1x128xf32> to vector<1x128xf32>
    %cst_257 = arith.constant dense<0.000000e+00> : vector<128xf32>
    %778 = vector.multi_reduction <add>, %775, %cst_257 [0] : vector<8x128xf32> to vector<128xf32>
    %779 = vector.shape_cast %778 : vector<128xf32> to vector<1x128xf32>
    %780 = arith.addf %777, %779 : vector<1x128xf32>
    %c0_258 = arith.constant 0 : index
    %c24_259 = arith.constant 24 : index
    %c0_260 = arith.constant 0 : index
    %781 = vector.load %arg4[%c0_258, %c24_259, %c0_260] : memref<1x32x128xf32, #tpu.memory_space<vmem>>, vector<1x1x128xf32>
    %782 = vector.shape_cast %781 : vector<1x1x128xf32> to vector<1x128xf32>
    %783 = vector.shape_cast %780 : vector<1x128xf32> to vector<1x1x128xf32>
    tpu.vector_store %arg4[%c0_258, %c24_259, %c0_260], %783 {strides = array<i32>} : memref<1x32x128xf32, #tpu.memory_space<vmem>>, vector<1x1x128xf32>,
    return
  }
  func.func @transform_0(%arg0: i32, %arg1: i32) -> i32 {
    %c0_i32 = arith.constant 0 : i32
    %c0_i32_0 = arith.constant 0 : i32
    return %c0_i32 : i32
  }
  func.func @transform_1(%arg0: i32, %arg1: i32) -> (i32, i32, i32, i32) {
    %c0_i32 = arith.constant 0 : i32
    %c0_i32_0 = arith.constant 0 : i32
    %c0_i32_1 = arith.constant 0 : i32
    return %arg0, %c0_i32, %arg1, %c0_i32_0 : i32, i32, i32, i32
  }
  func.func @transform_2(%arg0: i32, %arg1: i32) -> (i32, i32, i32) {
    %c0_i32 = arith.constant 0 : i32
    %c0_i32_0 = arith.constant 0 : i32
    %c0_i32_1 = arith.constant 0 : i32
    return %arg0, %c0_i32, %c0_i32_0 : i32, i32, i32
  }
}

</mosaic_0001>

<llo_original>
// kernel: tpu_custom_call.1
$region0: #{tpu_custom_call.1}
  #allocation0 [shape = 'u32[]', space=smem, size = 0x4, offset = 0x4, fixed_abs, tag = 'smem constant byte address 0x4 - core index']
  #allocation1 [shape = 'u32[144,128]{1,0:T(1,128)}', space=vmem, size = 0x12000, scoped, tag = 'internal scratch']
  %s0 = inlined_call_operand.hbm [shape: f32[150], index: 0, kind: input, shape index: {}]
  %s1 = inlined_call_operand.hbm [shape: f32[2,3,8,128], index: 1, kind: input, shape index: {}]
  %s2 = inlined_call_operand.hbm [shape: f32[2,32,128], index: 2, kind: output, shape index: {}]
  %s3 = sld [smem:[#allocation0]]
  $region53: #{tpu_custom_call.1} parent=0
    _
  %s5 = ssub.s32 1, %s3
  %s6 = scalar_select 0, %s5, %s3
  $region1: #{tpu_custom_call.1} parent=0
    #allocation2 [shape = 'u8[1024]{0}', space=smem, size = 0x400, scoped, tag = 'input window, operand 0, single buffered']
    #allocation3 [shape = 's32[2]{0}', space=sflag, size = 0x8, scoped, tag = 'scoped memory for tpu_custom_call.1']
    #allocation4 [shape = 's32[2]{0}', space=sflag, size = 0x8, scoped, tag = 'scoped memory for tpu_custom_call.1']
    #allocation5 [shape = 's32[2]{0}', space=sflag, size = 0x8, scoped, tag = 'scoped memory for tpu_custom_call.1']
    #allocation6 [shape = 'u8[24576]{0}', space=vmem, size = 0x6000, scoped, tag = 'input window, operand 1']
    #allocation7 [shape = 'u8[32768]{0}', space=vmem, size = 0x8000, scoped, tag = 'output window, operand 0']
    %7 = vsyncpa [#allocation5], 0
    %8 = vsyncpa [#allocation3], 0
    %s9 = scalar_lea.sflag [#allocation3], 1
    %10 = vsyncpa %s9, 0
    %11 = vsyncpa [#allocation4], 0
    %s12 = scalar_lea.sflag [#allocation4], 1
    %13 = vsyncpa %s12, 0
    loop: start=0, step=1, limit=4
    $region2: #{tpu_custom_call.1} parent=1 // loop_pre_header
      _
    $region3: #{tpu_custom_call.1} parent=1 // loop_header
      %s15 = sphi 0, %s19
      %p16 = scmp.ge.s32.totalorder %s15, 4
      %s22 = sphi 0, %s34
      %s23 = sphi 0, %s30
      %s24 = sphi 0, %s22
      %s25 = sphi 0, %s23
      %s26 = sphi 0, %s24
      %s27 = sphi 0, %s25
      %s35 = sphi 0, %s35
      %s37 = sphi 0, %s35
      %s38 = sphi 0, %s37
      %s52 = sphi 0, %s38
      %s60 = sphi 0, %s62
      %s63 = sphi 0, %s60
      %s64 = sphi 0, %s63
      %s80 = sphi 0, %s64
      %s86 = sphi 0, %s88
      %s89 = sphi 0, %s86
      %s90 = sphi 0, %s89
      %s106 = sphi 0, %s90
    $region4: #{tpu_custom_call.1} parent=1 // loop_header_branch
      %18 = sbr.rel (%p16) target = $region8
    $region5: #{tpu_custom_call.1} parent=1 // loop_body
      %s20 = ssub.s32 %s15, 1
      %s21 = ssub.s32 %s15, 2
      %s28 = sadd.s32 1, %s23
      %p29 = scmp.ge.s32.totalorder %s28, 1
      %s30 = scalar_select %p29, 0, %s28
      %s31 = sadd.s32 1, %s22
      %s32 = scalar_select %p29, %s31, %s22
      %p33 = scmp.ge.s32.totalorder %s32, 2
      %s34 = scalar_select %p33, 0, %s32
      %s36 = sadd.s32 %s35, 1
      %p39 = scmp.eq.s32.totalorder %s15, 1
      %p40 = scmp.ne.s32.totalorder %s35, %s37
      %p41 = scmp.eq.s32.totalorder %s15, 0
      %p42 = por %p40, %p41
      %p43 = scmp.ne.s32.totalorder %s35, %s37
      %p44 = scmp.eq.s32.totalorder %s20, 1
      %p45 = por %p43, %p44
      %p46 = scmp.ne.s32.totalorder %s37, %s38
      %p47 = scmp.eq.s32.totalorder %s20, 0
      %p48 = por %p46, %p47
      %p49 = scmp.ne.s32.totalorder %s37, %s38
      %p50 = scmp.eq.s32.totalorder %s21, 1
      %p51 = por %p49, %p50
      %p53 = scmp.ne.s32.totalorder %s38, %s52
      %p54 = scmp.eq.s32.totalorder %s21, 0
      %p55 = por %p53, %p54
      %s56 = ssub.s32 %s22, %s34
      %s57 = ssub.s32 %s23, %s30
      %s58 = sor.u32 %s56, %s57
      %p59 = scmp.eq.s32.totalorder %s58, 0
      %s61 = sadd.s32 %s60, 1
      %s62 = scalar_select %p59, %s60, %s61
      %p65 = pneg %p59
      %p66 = scmp.eq.s32.totalorder %s15, 1
      %p67 = por %p65, %p66
      %p68 = scmp.ne.s32.totalorder %s60, %s63
      %p69 = scmp.eq.s32.totalorder %s15, 0
      %p70 = por %p68, %p69
      %p71 = scmp.ne.s32.totalorder %s60, %s63
      %p72 = scmp.eq.s32.totalorder %s20, 1
      %p73 = por %p71, %p72
      %p74 = scmp.ne.s32.totalorder %s63, %s64
      %p75 = scmp.eq.s32.totalorder %s20, 0
      %p76 = por %p74, %p75
      %p77 = scmp.ne.s32.totalorder %s63, %s64
      %p78 = scmp.eq.s32.totalorder %s21, 1
      %p79 = por %p77, %p78
      %p81 = scmp.ne.s32.totalorder %s64, %s80
      %p82 = scmp.eq.s32.totalorder %s21, 0
      %p83 = por %p81, %p82
      %s84 = ssub.s32 %s22, %s34
      %p85 = scmp.eq.s32.totalorder %s84, 0
      %s87 = sadd.s32 %s86, 1
      %s88 = scalar_select %p85, %s86, %s87
      %p91 = pneg %p85
      %p92 = scmp.eq.s32.totalorder %s15, 1
      %p93 = por %p91, %p92
      %p94 = scmp.ne.s32.totalorder %s86, %s89
      %p95 = scmp.eq.s32.totalorder %s15, 0
      %p96 = por %p94, %p95
      %p97 = scmp.ne.s32.totalorder %s86, %s89
      %p98 = scmp.eq.s32.totalorder %s20, 1
      %p99 = por %p97, %p98
      %p100 = scmp.ne.s32.totalorder %s89, %s90
      %p101 = scmp.eq.s32.totalorder %s20, 0
      %p102 = por %p100, %p101
      %p103 = scmp.ne.s32.totalorder %s89, %s90
      %p104 = scmp.eq.s32.totalorder %s21, 1
      %p105 = por %p103, %p104
      %p107 = scmp.ne.s32.totalorder %s90, %s106
      %p108 = scmp.eq.s32.totalorder %s21, 0
      %p109 = por %p107, %p108
      %p110 = scmp.le.s32.totalorder 1, %s15
      %p111 = scmp.lt.s32.totalorder %s15, 3
      %p112 = pnand %p110, %p111
      %p113 = pneg %p112
      // Predicated region
      $region9: #{tpu_custom_call.1} parent=5 // pred_check
        _
      $region10: #{tpu_custom_call.1} parent=5 // pred_check_branch
        %115 = sbr.rel (%p112) target = $region12
      $region11: #{tpu_custom_call.1} parent=5 // pred_region
        %s116 = ssub.s32 %s15, 1
        // Predicated region
        $region13: #{tpu_custom_call.1} parent=11 // pred_check
          %p117 = pneg %p48
        $region14: #{tpu_custom_call.1} parent=11 // pred_check_branch
          %119 = sbr.rel (%p117) target = $region16
        $region15: #{tpu_custom_call.1} parent=11 // pred_region
          %s121 = ssub.s32 32, 32
          %122 = vsyncadd [#allocation5], %s121
          %125 = dma.hbm_to_smem %s0, 32, [#allocation2], [#allocation5]
        $region16: #{tpu_custom_call.1} parent=11 // pred_fallthru
          _
      $region12: #{tpu_custom_call.1} parent=5 // pred_fallthru
        _
      %p126 = scmp.lt.s32.totalorder %s15, 2
      // Predicated region
      $region17: #{tpu_custom_call.1} parent=5 // pred_check
        %p127 = pneg %p126
      $region18: #{tpu_custom_call.1} parent=5 // pred_check_branch
        %129 = sbr.rel (%p127) target = $region20
      $region19: #{tpu_custom_call.1} parent=5 // pred_region
        // Predicated region
        $region21: #{tpu_custom_call.1} parent=19 // pred_check
          %p130 = pneg %p70
        $region22: #{tpu_custom_call.1} parent=19 // pred_check_branch
          %132 = sbr.rel (%p130) target = $region24
        $region23: #{tpu_custom_call.1} parent=19 // pred_region
          %s133 = sand.u32 %s60, 1
          %s134 = scalar_lea.sflag [#allocation3], %s133
          %s135 = sand.u32 %s60, 1
          %s136 = smul.addr %s135, 24
          %s137 = scalar_lea.vmem [#allocation6], %s136
          %s139 = ssub.s32 384, 384
          %140 = vsyncadd %s134, %s139
          %s141 = smul.addr %s22, 3
          %s142 = sadd.s32 %s23, %s141
          %s143 = smul.addr %s142, 128
          %s144 = scalar_lea.hbm %s1, %s143
          %s145 = sshll.u32 %s137, 4
          %s146 = int_to_ptr.vmem [resolvable:$true] %s145
          %151 = dma.hbm_to_vmem [thread:$0]  %s144, 384, %s146, %s134, 128, 128, 8
        $region24: #{tpu_custom_call.1} parent=19 // pred_fallthru
          _
      $region20: #{tpu_custom_call.1} parent=5 // pred_fallthru
        _
      %p152 = scmp.le.s32.totalorder 1, %s15
      %p153 = scmp.lt.s32.totalorder %s15, 3
      %p154 = pnand %p152, %p153
      %p155 = pneg %p154
      // Predicated region
      $region25: #{tpu_custom_call.1} parent=5 // pred_check
        _
      $region26: #{tpu_custom_call.1} parent=5 // pred_check_branch
        %157 = sbr.rel (%p154) target = $region28
      $region27: #{tpu_custom_call.1} parent=5 // pred_region
        %s158 = ssub.s32 %s15, 1
        // Predicated region
        $region29: #{tpu_custom_call.1} parent=27 // pred_check
          %p159 = pneg %p48
        $region30: #{tpu_custom_call.1} parent=27 // pred_check_branch
          %161 = sbr.rel (%p159) target = $region32
        $region31: #{tpu_custom_call.1} parent=27 // pred_region
          %162 = dma.done [#allocation5], 32
        $region32: #{tpu_custom_call.1} parent=27 // pred_fallthru
          _
        %s163 = sand.u32 %s63, 1
        %s164 = scalar_lea.sflag [#allocation3], %s163
        %s165 = sand.u32 %s63, 1
        %s166 = smul.addr %s165, 24
        %s167 = scalar_lea.vmem [#allocation6], %s166
        // Predicated region
        $region33: #{tpu_custom_call.1} parent=27 // pred_check
          %p168 = pneg %p76
        $region34: #{tpu_custom_call.1} parent=27 // pred_check_branch
          %170 = sbr.rel (%p168) target = $region36
        $region35: #{tpu_custom_call.1} parent=27 // pred_region
          %171 = dma.done %s164, 384
        $region36: #{tpu_custom_call.1} parent=27 // pred_fallthru
          _
        %172 = sfence
        %p173 = pneg %p48
        %p174 = pneg %p45
        %s175 = sand.u32 %s63, 1
        %s176 = scalar_lea.sflag [#allocation3], %s175
        %s177 = sand.u32 %s63, 1
        %s178 = smul.addr %s177, 24
        %s179 = scalar_lea.vmem [#allocation6], %s178
        %p180 = pneg %p76
        %p181 = pneg %p73
        %p182 = pneg %p102
        %p183 = pneg %p99
        %s184 = sand.u32 %s89, 1
        %s185 = scalar_lea.sflag [#allocation4], %s184
        %s186 = sand.u32 %s89, 1
        %s187 = smul.addr %s186, 32
        %s188 = scalar_lea.vmem [#allocation7], %s187
        %p189 = scmp.eq.s32.totalorder %s25, 0
        // Predicated region
        $region37: #{tpu_custom_call.1} parent=27 // pred_check
          %p190 = pneg %p189
        $region38: #{tpu_custom_call.1} parent=27 // pred_check_branch
          %192 = sbr.rel (%p190) target = $region40
        $region39: #{tpu_custom_call.1} parent=27 // pred_region
          %193 = vst [vmem:[%s188] sm:$0xff] 0.0
          %194 = vst [vmem:[%s188 + $0x8] sm:$0xff] 0.0
          %195 = vst [vmem:[%s188 + $0x10] sm:$0xff] 0.0
          %196 = vst [vmem:[%s188 + $0x18] sm:$0xff] 0.0
        $region40: #{tpu_custom_call.1} parent=27 // pred_fallthru
          _
        %s197 = smul.u32 %s24, 3
        %s198 = sld [smem:[#allocation2 + %s197]]
        %s199 = sadd.s32 %s197, 1
        %s200 = sld [smem:[#allocation2 + %s199]]
        %s201 = sadd.s32 %s197, 2
        %s202 = sld [smem:[#allocation2 + %s201]]
        %s203 = sadd.s32 %s24, 2
        %s204 = smul.u32 %s203, 3
        %s205 = sld [smem:[#allocation2 + %s204]]
        %s206 = sadd.s32 %s204, 1
        %s207 = sld [smem:[#allocation2 + %s206]]
        %s208 = sadd.s32 %s204, 2
        %s209 = sld [smem:[#allocation2 + %s208]]
        %s210 = sadd.s32 %s24, 4
        %s211 = smul.u32 %s210, 3
        %s212 = sld [smem:[#allocation2 + %s211]]
        %s213 = sadd.s32 %s211, 1
        %s214 = sld [smem:[#allocation2 + %s213]]
        %s215 = sadd.s32 %s211, 2
        %s216 = sld [smem:[#allocation2 + %s215]]
        %s217 = sadd.s32 %s24, 6
        %s218 = smul.u32 %s217, 3
        %s219 = sld [smem:[#allocation2 + %s218]]
        %s220 = sadd.s32 %s218, 1
        %s221 = sld [smem:[#allocation2 + %s220]]
        %s222 = sadd.s32 %s218, 2
        %s223 = sld [smem:[#allocation2 + %s222]]
        %s224 = sadd.s32 %s24, 8
        %s225 = smul.u32 %s224, 3
        %s226 = sld [smem:[#allocation2 + %s225]]
        %s227 = sadd.s32 %s225, 1
        %s228 = sld [smem:[#allocation2 + %s227]]
        %s229 = sadd.s32 %s225, 2
        %s230 = sld [smem:[#allocation2 + %s229]]
        %s231 = sadd.s32 %s24, 10
        %s232 = smul.u32 %s231, 3
        %s233 = sld [smem:[#allocation2 + %s232]]
        %s234 = sadd.s32 %s232, 1
        %s235 = sld [smem:[#allocation2 + %s234]]
        %s236 = sadd.s32 %s232, 2
        %s237 = sld [smem:[#allocation2 + %s236]]
        %s238 = sadd.s32 %s24, 12
        %s239 = smul.u32 %s238, 3
        %s240 = sld [smem:[#allocation2 + %s239]]
        %s241 = sadd.s32 %s239, 1
        %s242 = sld [smem:[#allocation2 + %s241]]
        %s243 = sadd.s32 %s239, 2
        %s244 = sld [smem:[#allocation2 + %s243]]
        %s245 = sadd.s32 %s24, 14
        %s246 = smul.u32 %s245, 3
        %s247 = sld [smem:[#allocation2 + %s246]]
        %s248 = sadd.s32 %s246, 1
        %s249 = sld [smem:[#allocation2 + %s248]]
        %s250 = sadd.s32 %s246, 2
        %s251 = sld [smem:[#allocation2 + %s250]]
        %s252 = sadd.s32 %s24, 16
        %s253 = smul.u32 %s252, 3
        %s254 = sld [smem:[#allocation2 + %s253]]
        %s255 = sadd.s32 %s253, 1
        %s256 = sld [smem:[#allocation2 + %s255]]
        %s257 = sadd.s32 %s253, 2
        %s258 = sld [smem:[#allocation2 + %s257]]
        %s259 = sadd.s32 %s24, 18
        %s260 = smul.u32 %s259, 3
        %s261 = sld [smem:[#allocation2 + %s260]]
        %s262 = sadd.s32 %s260, 1
        %s263 = sld [smem:[#allocation2 + %s262]]
        %s264 = sadd.s32 %s260, 2
        %s265 = sld [smem:[#allocation2 + %s264]]
        %s266 = sadd.s32 %s24, 20
        %s267 = smul.u32 %s266, 3
        %s268 = sld [smem:[#allocation2 + %s267]]
        %s269 = sadd.s32 %s267, 1
        %s270 = sld [smem:[#allocation2 + %s269]]
        %s271 = sadd.s32 %s267, 2
        %s272 = sld [smem:[#allocation2 + %s271]]
        %s273 = sadd.s32 %s24, 22
        %s274 = smul.u32 %s273, 3
        %s275 = sld [smem:[#allocation2 + %s274]]
        %s276 = sadd.s32 %s274, 1
        %s277 = sld [smem:[#allocation2 + %s276]]
        %s278 = sadd.s32 %s274, 2
        %s279 = sld [smem:[#allocation2 + %s278]]
        %s280 = sadd.s32 %s24, 24
        %s281 = smul.u32 %s280, 3
        %s282 = sld [smem:[#allocation2 + %s281]]
        %s283 = sadd.s32 %s281, 1
        %s284 = sld [smem:[#allocation2 + %s283]]
        %s285 = sadd.s32 %s281, 2
        %s286 = sld [smem:[#allocation2 + %s285]]
        %s287 = sadd.s32 %s24, 26
        %s288 = smul.u32 %s287, 3
        %s289 = sld [smem:[#allocation2 + %s288]]
        %s290 = sadd.s32 %s288, 1
        %s291 = sld [smem:[#allocation2 + %s290]]
        %s292 = sadd.s32 %s288, 2
        %s293 = sld [smem:[#allocation2 + %s292]]
        %s294 = sadd.s32 %s24, 28
        %s295 = smul.u32 %s294, 3
        %s296 = sld [smem:[#allocation2 + %s295]]
        %s297 = sadd.s32 %s295, 1
        %s298 = sld [smem:[#allocation2 + %s297]]
        %s299 = sadd.s32 %s295, 2
        %s300 = sld [smem:[#allocation2 + %s299]]
        %s301 = sadd.s32 %s24, 30
        %s302 = smul.u32 %s301, 3
        %s303 = sld [smem:[#allocation2 + %s302]]
        %s304 = sadd.s32 %s302, 1
        %s305 = sld [smem:[#allocation2 + %s304]]
        %s306 = sadd.s32 %s302, 2
        %s307 = sld [smem:[#allocation2 + %s306]]
        %s308 = sadd.s32 %s24, 32
        %s309 = smul.u32 %s308, 3
        %s310 = sld [smem:[#allocation2 + %s309]]
        %s311 = sadd.s32 %s309, 1
        %s312 = sld [smem:[#allocation2 + %s311]]
        %s313 = sadd.s32 %s309, 2
        %s314 = sld [smem:[#allocation2 + %s313]]
        %s315 = sadd.s32 %s24, 34
        %s316 = smul.u32 %s315, 3
        %s317 = sld [smem:[#allocation2 + %s316]]
        %s318 = sadd.s32 %s316, 1
        %s319 = sld [smem:[#allocation2 + %s318]]
        %s320 = sadd.s32 %s316, 2
        %s321 = sld [smem:[#allocation2 + %s320]]
        %s322 = sadd.s32 %s24, 36
        %s323 = smul.u32 %s322, 3
        %s324 = sld [smem:[#allocation2 + %s323]]
        %s325 = sadd.s32 %s323, 1
        %s326 = sld [smem:[#allocation2 + %s325]]
        %s327 = sadd.s32 %s323, 2
        %s328 = sld [smem:[#allocation2 + %s327]]
        %s329 = sadd.s32 %s24, 38
        %s330 = smul.u32 %s329, 3
        %s331 = sld [smem:[#allocation2 + %s330]]
        %s332 = sadd.s32 %s330, 1
        %s333 = sld [smem:[#allocation2 + %s332]]
        %s334 = sadd.s32 %s330, 2
        %s335 = sld [smem:[#allocation2 + %s334]]
        %s336 = sadd.s32 %s24, 40
        %s337 = smul.u32 %s336, 3
        %s338 = sld [smem:[#allocation2 + %s337]]
        %s339 = sadd.s32 %s337, 1
        %s340 = sld [smem:[#allocation2 + %s339]]
        %s341 = sadd.s32 %s337, 2
        %s342 = sld [smem:[#allocation2 + %s341]]
        %s343 = sadd.s32 %s24, 42
        %s344 = smul.u32 %s343, 3
        %s345 = sld [smem:[#allocation2 + %s344]]
        %s346 = sadd.s32 %s344, 1
        %s347 = sld [smem:[#allocation2 + %s346]]
        %s348 = sadd.s32 %s344, 2
        %s349 = sld [smem:[#allocation2 + %s348]]
        %s350 = sadd.s32 %s24, 44
        %s351 = smul.u32 %s350, 3
        %s352 = sld [smem:[#allocation2 + %s351]]
        %s353 = sadd.s32 %s351, 1
        %s354 = sld [smem:[#allocation2 + %s353]]
        %s355 = sadd.s32 %s351, 2
        %s356 = sld [smem:[#allocation2 + %s355]]
        %s357 = sadd.s32 %s24, 46
        %s358 = smul.u32 %s357, 3
        %s359 = sld [smem:[#allocation2 + %s358]]
        %s360 = sadd.s32 %s358, 1
        %s361 = sld [smem:[#allocation2 + %s360]]
        %s362 = sadd.s32 %s358, 2
        %s363 = sld [smem:[#allocation2 + %s362]]
        %s364 = sadd.s32 %s24, 48
        %s365 = smul.u32 %s364, 3
        %s366 = sld [smem:[#allocation2 + %s365]]
        %s367 = sadd.s32 %s365, 1
        %s368 = sld [smem:[#allocation2 + %s367]]
        %s369 = sadd.s32 %s365, 2
        %s370 = sld [smem:[#allocation2 + %s369]]
        %v371 = vld [vmem:[%s167] sm:$0xff]
        %s372 = scalar_lea.vmem %s167, 8 [#allocation6]
        %v373 = vld [vmem:[%s372] sm:$0xff]
        %s374 = scalar_lea.vmem %s167, 16 [#allocation6]
        %v375 = vld [vmem:[%s374] sm:$0xff]
        %v376 = vstv %s198
        %v377 = vmul.f32 %v371, %v376
        %v378 = vstv %s200
        %v379 = vmul.f32 %v375, %v378
        %v380 = vadd.f32 %v377, %v379
        %v381 = vstv %s202
        %v382 = vsub.f32 %v381, %v373
        %v383 = vadd.f32 %v380, %v382
        %v384 = vand.u32 2147483647, %v383
        %vm385 = vcmp.lt.f32.partialorder %v384, 0.1
        %v386 = vsel %vm385, 1, 0
        %v387 = vcvt.s32.f32 %v386
        %v388 = vld [vmem:[%s188] sm:$0x1]
        %v389 = vrot.slane %v387, 4
        %v390 = vadd.f32 %v387, %v389
        %v391 = vrot.slane %v390, 2
        %v392 = vadd.f32 %v390, %v391
        %v393 = vrot.slane %v392, 1
        %v394 = vadd.f32 %v392, %v393
        %v395 = vadd.f32 %v388, %v394
        %396 = vst [vmem:[%s188] sm:$0x1] %v395
        %v397 = vstv %s205
        %v398 = vmul.f32 %v371, %v397
        %v399 = vstv %s207
        %v400 = vmul.f32 %v375, %v399
        %v401 = vadd.f32 %v398, %v400
        %v402 = vstv %s209
        %v403 = vsub.f32 %v402, %v373
        %v404 = vadd.f32 %v401, %v403
        %v405 = vand.u32 2147483647, %v404
        %vm406 = vcmp.lt.f32.partialorder %v405, 0.1
        %v407 = vsel %vm406, 1, 0
        %v408 = vcvt.s32.f32 %v407
        %v409 = vld [vmem:[%s188 + $0x1] sm:$0x1]
        %v410 = vrot.slane %v408, 4
        %v411 = vadd.f32 %v408, %v410
        %v412 = vrot.slane %v411, 2
        %v413 = vadd.f32 %v411, %v412
        %v414 = vrot.slane %v413, 1
        %v415 = vadd.f32 %v413, %v414
        %v416 = vadd.f32 %v409, %v415
        %417 = vst [vmem:[%s188 + $0x1] sm:$0x1] %v416
        %v418 = vstv %s212
        %v419 = vmul.f32 %v371, %v418
        %v420 = vstv %s214
        %v421 = vmul.f32 %v375, %v420
        %v422 = vadd.f32 %v419, %v421
        %v423 = vstv %s216
        %v424 = vsub.f32 %v423, %v373
        %v425 = vadd.f32 %v422, %v424
        %v426 = vand.u32 2147483647, %v425
        %vm427 = vcmp.lt.f32.partialorder %v426, 0.1
        %v428 = vsel %vm427, 1, 0
        %v429 = vcvt.s32.f32 %v428
        %v430 = vld [vmem:[%s188 + $0x2] sm:$0x1]
        %v431 = vrot.slane %v429, 4
        %v432 = vadd.f32 %v429, %v431
        %v433 = vrot.slane %v432, 2
        %v434 = vadd.f32 %v432, %v433
        %v435 = vrot.slane %v434, 1
        %v436 = vadd.f32 %v434, %v435
        %v437 = vadd.f32 %v430, %v436
        %438 = vst [vmem:[%s188 + $0x2] sm:$0x1] %v437
        %v439 = vstv %s219
        %v440 = vmul.f32 %v371, %v439
        %v441 = vstv %s221
        %v442 = vmul.f32 %v375, %v441
        %v443 = vadd.f32 %v440, %v442
        %v444 = vstv %s223
        %v445 = vsub.f32 %v444, %v373
        %v446 = vadd.f32 %v443, %v445
        %v447 = vand.u32 2147483647, %v446
        %vm448 = vcmp.lt.f32.partialorder %v447, 0.1
        %v449 = vsel %vm448, 1, 0
        %v450 = vcvt.s32.f32 %v449
        %v451 = vld [vmem:[%s188 + $0x3] sm:$0x1]
        %v452 = vrot.slane %v450, 4
        %v453 = vadd.f32 %v450, %v452
        %v454 = vrot.slane %v453, 2
        %v455 = vadd.f32 %v453, %v454
        %v456 = vrot.slane %v455, 1
        %v457 = vadd.f32 %v455, %v456
        %v458 = vadd.f32 %v451, %v457
        %459 = vst [vmem:[%s188 + $0x3] sm:$0x1] %v458
        %v460 = vstv %s226
        %v461 = vmul.f32 %v371, %v460
        %v462 = vstv %s228
        %v463 = vmul.f32 %v375, %v462
        %v464 = vadd.f32 %v461, %v463
        %v465 = vstv %s230
        %v466 = vsub.f32 %v465, %v373
        %v467 = vadd.f32 %v464, %v466
        %v468 = vand.u32 2147483647, %v467
        %vm469 = vcmp.lt.f32.partialorder %v468, 0.1
        %v470 = vsel %vm469, 1, 0
        %v471 = vcvt.s32.f32 %v470
        %v472 = vld [vmem:[%s188 + $0x4] sm:$0x1]
        %v473 = vrot.slane %v471, 4
        %v474 = vadd.f32 %v471, %v473
        %v475 = vrot.slane %v474, 2
        %v476 = vadd.f32 %v474, %v475
        %v477 = vrot.slane %v476, 1
        %v478 = vadd.f32 %v476, %v477
        %v479 = vadd.f32 %v472, %v478
        %480 = vst [vmem:[%s188 + $0x4] sm:$0x1] %v479
        %v481 = vstv %s233
        %v482 = vmul.f32 %v371, %v481
        %v483 = vstv %s235
        %v484 = vmul.f32 %v375, %v483
        %v485 = vadd.f32 %v482, %v484
        %v486 = vstv %s237
        %v487 = vsub.f32 %v486, %v373
        %v488 = vadd.f32 %v485, %v487
        %v489 = vand.u32 2147483647, %v488
        %vm490 = vcmp.lt.f32.partialorder %v489, 0.1
        %v491 = vsel %vm490, 1, 0
        %v492 = vcvt.s32.f32 %v491
        %v493 = vld [vmem:[%s188 + $0x5] sm:$0x1]
        %v494 = vrot.slane %v492, 4
        %v495 = vadd.f32 %v492, %v494
        %v496 = vrot.slane %v495, 2
        %v497 = vadd.f32 %v495, %v496
        %v498 = vrot.slane %v497, 1
        %v499 = vadd.f32 %v497, %v498
        %v500 = vadd.f32 %v493, %v499
        %501 = vst [vmem:[%s188 + $0x5] sm:$0x1] %v500
        %v502 = vstv %s240
        %v503 = vmul.f32 %v371, %v502
        %v504 = vstv %s242
        %v505 = vmul.f32 %v375, %v504
        %v506 = vadd.f32 %v503, %v505
        %v507 = vstv %s244
        %v508 = vsub.f32 %v507, %v373
        %v509 = vadd.f32 %v506, %v508
        %v510 = vand.u32 2147483647, %v509
        %vm511 = vcmp.lt.f32.partialorder %v510, 0.1
        %v512 = vsel %vm511, 1, 0
        %v513 = vcvt.s32.f32 %v512
        %v514 = vld [vmem:[%s188 + $0x6] sm:$0x1]
        %v515 = vrot.slane %v513, 4
        %v516 = vadd.f32 %v513, %v515
        %v517 = vrot.slane %v516, 2
        %v518 = vadd.f32 %v516, %v517
        %v519 = vrot.slane %v518, 1
        %v520 = vadd.f32 %v518, %v519
        %v521 = vadd.f32 %v514, %v520
        %522 = vst [vmem:[%s188 + $0x6] sm:$0x1] %v521
        %v523 = vstv %s247
        %v524 = vmul.f32 %v371, %v523
        %v525 = vstv %s249
        %v526 = vmul.f32 %v375, %v525
        %v527 = vadd.f32 %v524, %v526
        %v528 = vstv %s251
        %v529 = vsub.f32 %v528, %v373
        %v530 = vadd.f32 %v527, %v529
        %v531 = vand.u32 2147483647, %v530
        %vm532 = vcmp.lt.f32.partialorder %v531, 0.1
        %v533 = vsel %vm532, 1, 0
        %v534 = vcvt.s32.f32 %v533
        %v535 = vld [vmem:[%s188 + $0x7] sm:$0x1]
        %v536 = vrot.slane %v534, 4
        %v537 = vadd.f32 %v534, %v536
        %v538 = vrot.slane %v537, 2
        %v539 = vadd.f32 %v537, %v538
        %v540 = vrot.slane %v539, 1
        %v541 = vadd.f32 %v539, %v540
        %v542 = vadd.f32 %v535, %v541
        %543 = vst [vmem:[%s188 + $0x7] sm:$0x1] %v542
        %v544 = vstv %s254
        %v545 = vmul.f32 %v371, %v544
        %v546 = vstv %s256
        %v547 = vmul.f32 %v375, %v546
        %v548 = vadd.f32 %v545, %v547
        %v549 = vstv %s258
        %v550 = vsub.f32 %v549, %v373
        %v551 = vadd.f32 %v548, %v550
        %v552 = vand.u32 2147483647, %v551
        %vm553 = vcmp.lt.f32.partialorder %v552, 0.1
        %v554 = vsel %vm553, 1, 0
        %v555 = vcvt.s32.f32 %v554
        %v556 = vld [vmem:[%s188 + $0x8] sm:$0x1]
        %v557 = vrot.slane %v555, 4
        %v558 = vadd.f32 %v555, %v557
        %v559 = vrot.slane %v558, 2
        %v560 = vadd.f32 %v558, %v559
        %v561 = vrot.slane %v560, 1
        %v562 = vadd.f32 %v560, %v561
        %v563 = vadd.f32 %v556, %v562
        %564 = vst [vmem:[%s188 + $0x8] sm:$0x1] %v563
        %v565 = vstv %s261
        %v566 = vmul.f32 %v371, %v565
        %v567 = vstv %s263
        %v568 = vmul.f32 %v375, %v567
        %v569 = vadd.f32 %v566, %v568
        %v570 = vstv %s265
        %v571 = vsub.f32 %v570, %v373
        %v572 = vadd.f32 %v569, %v571
        %v573 = vand.u32 2147483647, %v572
        %vm574 = vcmp.lt.f32.partialorder %v573, 0.1
        %v575 = vsel %vm574, 1, 0
        %v576 = vcvt.s32.f32 %v575
        %v577 = vld [vmem:[%s188 + $0x9] sm:$0x1]
        %v578 = vrot.slane %v576, 4
        %v579 = vadd.f32 %v576, %v578
        %v580 = vrot.slane %v579, 2
        %v581 = vadd.f32 %v579, %v580
        %v582 = vrot.slane %v581, 1
        %v583 = vadd.f32 %v581, %v582
        %v584 = vadd.f32 %v577, %v583
        %585 = vst [vmem:[%s188 + $0x9] sm:$0x1] %v584
        %v586 = vstv %s268
        %v587 = vmul.f32 %v371, %v586
        %v588 = vstv %s270
        %v589 = vmul.f32 %v375, %v588
        %v590 = vadd.f32 %v587, %v589
        %v591 = vstv %s272
        %v592 = vsub.f32 %v591, %v373
        %v593 = vadd.f32 %v590, %v592
        %v594 = vand.u32 2147483647, %v593
        %vm595 = vcmp.lt.f32.partialorder %v594, 0.1
        %v596 = vsel %vm595, 1, 0
        %v597 = vcvt.s32.f32 %v596
        %v598 = vld [vmem:[%s188 + $0xa] sm:$0x1]
        %v599 = vrot.slane %v597, 4
        %v600 = vadd.f32 %v597, %v599
        %v601 = vrot.slane %v600, 2
        %v602 = vadd.f32 %v600, %v601
        %v603 = vrot.slane %v602, 1
        %v604 = vadd.f32 %v602, %v603
        %v605 = vadd.f32 %v598, %v604
        %606 = vst [vmem:[%s188 + $0xa] sm:$0x1] %v605
        %v607 = vstv %s275
        %v608 = vmul.f32 %v371, %v607
        %v609 = vstv %s277
        %v610 = vmul.f32 %v375, %v609
        %v611 = vadd.f32 %v608, %v610
        %v612 = vstv %s279
        %v613 = vsub.f32 %v612, %v373
        %v614 = vadd.f32 %v611, %v613
        %v615 = vand.u32 2147483647, %v614
        %vm616 = vcmp.lt.f32.partialorder %v615, 0.1
        %v617 = vsel %vm616, 1, 0
        %v618 = vcvt.s32.f32 %v617
        %v619 = vld [vmem:[%s188 + $0xb] sm:$0x1]
        %v620 = vrot.slane %v618, 4
        %v621 = vadd.f32 %v618, %v620
        %v622 = vrot.slane %v621, 2
        %v623 = vadd.f32 %v621, %v622
        %v624 = vrot.slane %v623, 1
        %v625 = vadd.f32 %v623, %v624
        %v626 = vadd.f32 %v619, %v625
        %627 = vst [vmem:[%s188 + $0xb] sm:$0x1] %v626
        %v628 = vstv %s282
        %v629 = vmul.f32 %v371, %v628
        %v630 = vstv %s284
        %v631 = vmul.f32 %v375, %v630
        %v632 = vadd.f32 %v629, %v631
        %v633 = vstv %s286
        %v634 = vsub.f32 %v633, %v373
        %v635 = vadd.f32 %v632, %v634
        %v636 = vand.u32 2147483647, %v635
        %vm637 = vcmp.lt.f32.partialorder %v636, 0.1
        %v638 = vsel %vm637, 1, 0
        %v639 = vcvt.s32.f32 %v638
        %v640 = vld [vmem:[%s188 + $0xc] sm:$0x1]
        %v641 = vrot.slane %v639, 4
        %v642 = vadd.f32 %v639, %v641
        %v643 = vrot.slane %v642, 2
        %v644 = vadd.f32 %v642, %v643
        %v645 = vrot.slane %v644, 1
        %v646 = vadd.f32 %v644, %v645
        %v647 = vadd.f32 %v640, %v646
        %648 = vst [vmem:[%s188 + $0xc] sm:$0x1] %v647
        %v649 = vstv %s289
        %v650 = vmul.f32 %v371, %v649
        %v651 = vstv %s291
        %v652 = vmul.f32 %v375, %v651
        %v653 = vadd.f32 %v650, %v652
        %v654 = vstv %s293
        %v655 = vsub.f32 %v654, %v373
        %v656 = vadd.f32 %v653, %v655
        %v657 = vand.u32 2147483647, %v656
        %vm658 = vcmp.lt.f32.partialorder %v657, 0.1
        %v659 = vsel %vm658, 1, 0
        %v660 = vcvt.s32.f32 %v659
        %v661 = vld [vmem:[%s188 + $0xd] sm:$0x1]
        %v662 = vrot.slane %v660, 4
        %v663 = vadd.f32 %v660, %v662
        %v664 = vrot.slane %v663, 2
        %v665 = vadd.f32 %v663, %v664
        %v666 = vrot.slane %v665, 1
        %v667 = vadd.f32 %v665, %v666
        %v668 = vadd.f32 %v661, %v667
        %669 = vst [vmem:[%s188 + $0xd] sm:$0x1] %v668
        %v670 = vstv %s296
        %v671 = vmul.f32 %v371, %v670
        %v672 = vstv %s298
        %v673 = vmul.f32 %v375, %v672
        %v674 = vadd.f32 %v671, %v673
        %v675 = vstv %s300
        %v676 = vsub.f32 %v675, %v373
        %v677 = vadd.f32 %v674, %v676
        %v678 = vand.u32 2147483647, %v677
        %vm679 = vcmp.lt.f32.partialorder %v678, 0.1
        %v680 = vsel %vm679, 1, 0
        %v681 = vcvt.s32.f32 %v680
        %v682 = vld [vmem:[%s188 + $0xe] sm:$0x1]
        %v683 = vrot.slane %v681, 4
        %v684 = vadd.f32 %v681, %v683
        %v685 = vrot.slane %v684, 2
        %v686 = vadd.f32 %v684, %v685
        %v687 = vrot.slane %v686, 1
        %v688 = vadd.f32 %v686, %v687
        %v689 = vadd.f32 %v682, %v688
        %690 = vst [vmem:[%s188 + $0xe] sm:$0x1] %v689
        %v691 = vstv %s303
        %v692 = vmul.f32 %v371, %v691
        %v693 = vstv %s305
        %v694 = vmul.f32 %v375, %v693
        %v695 = vadd.f32 %v692, %v694
        %v696 = vstv %s307
        %v697 = vsub.f32 %v696, %v373
        %v698 = vadd.f32 %v695, %v697
        %v699 = vand.u32 2147483647, %v698
        %vm700 = vcmp.lt.f32.partialorder %v699, 0.1
        %v701 = vsel %vm700, 1, 0
        %v702 = vcvt.s32.f32 %v701
        %v703 = vld [vmem:[%s188 + $0xf] sm:$0x1]
        %v704 = vrot.slane %v702, 4
        %v705 = vadd.f32 %v702, %v704
        %v706 = vrot.slane %v705, 2
        %v707 = vadd.f32 %v705, %v706
        %v708 = vrot.slane %v707, 1
        %v709 = vadd.f32 %v707, %v708
        %v710 = vadd.f32 %v703, %v709
        %711 = vst [vmem:[%s188 + $0xf] sm:$0x1] %v710
        %v712 = vstv %s310
        %v713 = vmul.f32 %v371, %v712
        %v714 = vstv %s312
        %v715 = vmul.f32 %v375, %v714
        %v716 = vadd.f32 %v713, %v715
        %v717 = vstv %s314
        %v718 = vsub.f32 %v717, %v373
        %v719 = vadd.f32 %v716, %v718
        %v720 = vand.u32 2147483647, %v719
        %vm721 = vcmp.lt.f32.partialorder %v720, 0.1
        %v722 = vsel %vm721, 1, 0
        %v723 = vcvt.s32.f32 %v722
        %v724 = vld [vmem:[%s188 + $0x10] sm:$0x1]
        %v725 = vrot.slane %v723, 4
        %v726 = vadd.f32 %v723, %v725
        %v727 = vrot.slane %v726, 2
        %v728 = vadd.f32 %v726, %v727
        %v729 = vrot.slane %v728, 1
        %v730 = vadd.f32 %v728, %v729
        %v731 = vadd.f32 %v724, %v730
        %732 = vst [vmem:[%s188 + $0x10] sm:$0x1] %v731
        %v733 = vstv %s317
        %v734 = vmul.f32 %v371, %v733
        %v735 = vstv %s319
        %v736 = vmul.f32 %v375, %v735
        %v737 = vadd.f32 %v734, %v736
        %v738 = vstv %s321
        %v739 = vsub.f32 %v738, %v373
        %v740 = vadd.f32 %v737, %v739
        %v741 = vand.u32 2147483647, %v740
        %vm742 = vcmp.lt.f32.partialorder %v741, 0.1
        %v743 = vsel %vm742, 1, 0
        %v744 = vcvt.s32.f32 %v743
        %v745 = vld [vmem:[%s188 + $0x11] sm:$0x1]
        %v746 = vrot.slane %v744, 4
        %v747 = vadd.f32 %v744, %v746
        %v748 = vrot.slane %v747, 2
        %v749 = vadd.f32 %v747, %v748
        %v750 = vrot.slane %v749, 1
        %v751 = vadd.f32 %v749, %v750
        %v752 = vadd.f32 %v745, %v751
        %753 = vst [vmem:[%s188 + $0x11] sm:$0x1] %v752
        %v754 = vstv %s324
        %v755 = vmul.f32 %v371, %v754
        %v756 = vstv %s326
        %v757 = vmul.f32 %v375, %v756
        %v758 = vadd.f32 %v755, %v757
        %v759 = vstv %s328
        %v760 = vsub.f32 %v759, %v373
        %v761 = vadd.f32 %v758, %v760
        %v762 = vand.u32 2147483647, %v761
        %vm763 = vcmp.lt.f32.partialorder %v762, 0.1
        %v764 = vsel %vm763, 1, 0
        %v765 = vcvt.s32.f32 %v764
        %v766 = vld [vmem:[%s188 + $0x12] sm:$0x1]
        %v767 = vrot.slane %v765, 4
        %v768 = vadd.f32 %v765, %v767
        %v769 = vrot.slane %v768, 2
        %v770 = vadd.f32 %v768, %v769
        %v771 = vrot.slane %v770, 1
        %v772 = vadd.f32 %v770, %v771
        %v773 = vadd.f32 %v766, %v772
        %774 = vst [vmem:[%s188 + $0x12] sm:$0x1] %v773
        %v775 = vstv %s331
        %v776 = vmul.f32 %v371, %v775
        %v777 = vstv %s333
        %v778 = vmul.f32 %v375, %v777
        %v779 = vadd.f32 %v776, %v778
        %v780 = vstv %s335
        %v781 = vsub.f32 %v780, %v373
        %v782 = vadd.f32 %v779, %v781
        %v783 = vand.u32 2147483647, %v782
        %vm784 = vcmp.lt.f32.partialorder %v783, 0.1
        %v785 = vsel %vm784, 1, 0
        %v786 = vcvt.s32.f32 %v785
        %v787 = vld [vmem:[%s188 + $0x13] sm:$0x1]
        %v788 = vrot.slane %v786, 4
        %v789 = vadd.f32 %v786, %v788
        %v790 = vrot.slane %v789, 2
        %v791 = vadd.f32 %v789, %v790
        %v792 = vrot.slane %v791, 1
        %v793 = vadd.f32 %v791, %v792
        %v794 = vadd.f32 %v787, %v793
        %795 = vst [vmem:[%s188 + $0x13] sm:$0x1] %v794
        %v796 = vstv %s338
        %v797 = vmul.f32 %v371, %v796
        %v798 = vstv %s340
        %v799 = vmul.f32 %v375, %v798
        %v800 = vadd.f32 %v797, %v799
        %v801 = vstv %s342
        %v802 = vsub.f32 %v801, %v373
        %v803 = vadd.f32 %v800, %v802
        %v804 = vand.u32 2147483647, %v803
        %vm805 = vcmp.lt.f32.partialorder %v804, 0.1
        %v806 = vsel %vm805, 1, 0
        %v807 = vcvt.s32.f32 %v806
        %v808 = vld [vmem:[%s188 + $0x14] sm:$0x1]
        %v809 = vrot.slane %v807, 4
        %v810 = vadd.f32 %v807, %v809
        %v811 = vrot.slane %v810, 2
        %v812 = vadd.f32 %v810, %v811
        %v813 = vrot.slane %v812, 1
        %v814 = vadd.f32 %v812, %v813
        %v815 = vadd.f32 %v808, %v814
        %816 = vst [vmem:[%s188 + $0x14] sm:$0x1] %v815
        %v817 = vstv %s345
        %v818 = vmul.f32 %v371, %v817
        %v819 = vstv %s347
        %v820 = vmul.f32 %v375, %v819
        %v821 = vadd.f32 %v818, %v820
        %v822 = vstv %s349
        %v823 = vsub.f32 %v822, %v373
        %v824 = vadd.f32 %v821, %v823
        %v825 = vand.u32 2147483647, %v824
        %vm826 = vcmp.lt.f32.partialorder %v825, 0.1
        %v827 = vsel %vm826, 1, 0
        %v828 = vcvt.s32.f32 %v827
        %v829 = vld [vmem:[%s188 + $0x15] sm:$0x1]
        %v830 = vrot.slane %v828, 4
        %v831 = vadd.f32 %v828, %v830
        %v832 = vrot.slane %v831, 2
        %v833 = vadd.f32 %v831, %v832
        %v834 = vrot.slane %v833, 1
        %v835 = vadd.f32 %v833, %v834
        %v836 = vadd.f32 %v829, %v835
        %837 = vst [vmem:[%s188 + $0x15] sm:$0x1] %v836
        %v838 = vstv %s352
        %v839 = vmul.f32 %v371, %v838
        %v840 = vstv %s354
        %v841 = vmul.f32 %v375, %v840
        %v842 = vadd.f32 %v839, %v841
        %v843 = vstv %s356
        %v844 = vsub.f32 %v843, %v373
        %v845 = vadd.f32 %v842, %v844
        %v846 = vand.u32 2147483647, %v845
        %vm847 = vcmp.lt.f32.partialorder %v846, 0.1
        %v848 = vsel %vm847, 1, 0
        %v849 = vcvt.s32.f32 %v848
        %v850 = vld [vmem:[%s188 + $0x16] sm:$0x1]
        %v851 = vrot.slane %v849, 4
        %v852 = vadd.f32 %v849, %v851
        %v853 = vrot.slane %v852, 2
        %v854 = vadd.f32 %v852, %v853
        %v855 = vrot.slane %v854, 1
        %v856 = vadd.f32 %v854, %v855
        %v857 = vadd.f32 %v850, %v856
        %858 = vst [vmem:[%s188 + $0x16] sm:$0x1] %v857
        %v859 = vstv %s359
        %v860 = vmul.f32 %v371, %v859
        %v861 = vstv %s361
        %v862 = vmul.f32 %v375, %v861
        %v863 = vadd.f32 %v860, %v862
        %v864 = vstv %s363
        %v865 = vsub.f32 %v864, %v373
        %v866 = vadd.f32 %v863, %v865
        %v867 = vand.u32 2147483647, %v866
        %vm868 = vcmp.lt.f32.partialorder %v867, 0.1
        %v869 = vsel %vm868, 1, 0
        %v870 = vcvt.s32.f32 %v869
        %v871 = vld [vmem:[%s188 + $0x17] sm:$0x1]
        %v872 = vrot.slane %v870, 4
        %v873 = vadd.f32 %v870, %v872
        %v874 = vrot.slane %v873, 2
        %v875 = vadd.f32 %v873, %v874
        %v876 = vrot.slane %v875, 1
        %v877 = vadd.f32 %v875, %v876
        %v878 = vadd.f32 %v871, %v877
        %879 = vst [vmem:[%s188 + $0x17] sm:$0x1] %v878
        %v880 = vstv %s366
        %v881 = vmul.f32 %v371, %v880
        %v882 = vstv %s368
        %v883 = vmul.f32 %v375, %v882
        %v884 = vadd.f32 %v881, %v883
        %v885 = vstv %s370
        %v886 = vsub.f32 %v885, %v373
        %v887 = vadd.f32 %v884, %v886
        %v888 = vand.u32 2147483647, %v887
        %vm889 = vcmp.lt.f32.partialorder %v888, 0.1
        %v890 = vsel %vm889, 1, 0
        %v891 = vcvt.s32.f32 %v890
        %v892 = vld [vmem:[%s188 + $0x18] sm:$0x1]
        %v893 = vrot.slane %v891, 4
        %v894 = vadd.f32 %v891, %v893
        %v895 = vrot.slane %v894, 2
        %v896 = vadd.f32 %v894, %v895
        %v897 = vrot.slane %v896, 1
        %v898 = vadd.f32 %v896, %v897
        %v899 = vadd.f32 %v892, %v898
        %900 = vst [vmem:[%s188 + $0x18] sm:$0x1] %v899
        %s901 = sand.u32 %s89, 1
        %s902 = scalar_lea.sflag [#allocation4], %s901
        %s903 = sand.u32 %s89, 1
        %s904 = smul.addr %s903, 32
        %s905 = scalar_lea.vmem [#allocation7], %s904
        // Predicated region
        $region41: #{tpu_custom_call.1} parent=27 // pred_check
          %p906 = pneg %p99
        $region42: #{tpu_custom_call.1} parent=27 // pred_check_branch
          %908 = sbr.rel (%p906) target = $region44
        $region43: #{tpu_custom_call.1} parent=27 // pred_region
          %s910 = ssub.s32 512, 512
          %911 = vsyncadd %s902, %s910
          %s912 = smul.addr %s24, 4
          %s913 = smul.addr %s912, 128
          %s914 = scalar_lea.hbm %s2, %s913
          %s915 = sshll.u32 %s905, 4
          %s916 = int_to_ptr.vmem [resolvable:$true] %s915
          %921 = dma.vmem_to_hbm [thread:$0]  %s916, 512, %s914, %s902, 128, 128, 8
        $region44: #{tpu_custom_call.1} parent=27 // pred_fallthru
          _
      $region28: #{tpu_custom_call.1} parent=5 // pred_fallthru
        _
      %p922 = scmp.le.s32.totalorder 2, %s15
      // Predicated region
      $region45: #{tpu_custom_call.1} parent=5 // pred_check
        %p923 = pneg %p922
      $region46: #{tpu_custom_call.1} parent=5 // pred_check_branch
        %925 = sbr.rel (%p923) target = $region48
      $region47: #{tpu_custom_call.1} parent=5 // pred_region
        %s926 = ssub.s32 %s15, 2
        // Predicated region
        $region49: #{tpu_custom_call.1} parent=47 // pred_check
          %p927 = pneg %p105
        $region50: #{tpu_custom_call.1} parent=47 // pred_check_branch
          %929 = sbr.rel (%p927) target = $region52
        $region51: #{tpu_custom_call.1} parent=47 // pred_region
          %s930 = sand.u32 %s90, 1
          %s931 = scalar_lea.sflag [#allocation4], %s930
          %s932 = sand.u32 %s90, 1
          %s933 = smul.addr %s932, 32
          %s934 = scalar_lea.vmem [#allocation7], %s933
          %935 = dma.done %s931, 512
        $region52: #{tpu_custom_call.1} parent=47 // pred_fallthru
          _
      $region48: #{tpu_custom_call.1} parent=5 // pred_fallthru
        _
    $region6: #{tpu_custom_call.1} parent=1 // loop_footer
      %s19 = sadd.s32 1, %s15
    $region7: #{tpu_custom_call.1} parent=1 // loop_footer_branch
      %14 = sbr.rel target = $region3
    $region8: #{tpu_custom_call.1} parent=1 // loop_exit
      _
    %936 = vsyncpa [#allocation3], 1
    %s937 = scalar_lea.sflag [#allocation3], 1
    %938 = vsyncpa %s937, 1
    %939 = vsyncpa [#allocation4], 1
    %s940 = scalar_lea.sflag [#allocation4], 1
    %941 = vsyncpa %s940, 1
    %942 = vsyncpa [#allocation5], 1
    %s943 = scalar_lea.sflag [#allocation5], 1
    %944 = vsyncpa %s943, 1

</llo_original>
